<compile_context>
chip_gen: v7x
topology: tpu7x:2x2x1
jax: 0.10.0
libtpu: 0.0.40
codegen_flags: <defaults>
</compile_context>

<pallas_src>
import inspect

import jax
import jax.numpy as jnp
from jax.experimental import pallas as pl
from jax.experimental.pallas import tpu as pltpu

HIDDEN_DIM = 128
FFN_DIM = 256

# Feature probe (instead of a broad try/except that could swallow real
# lowering / VMEM errors): does this jax version support BlockSpec
# pipeline_mode / pl.Buffered?
try:
    _HAS_PIPELINE_MODE = (
        hasattr(pl, "Buffered")
        and "pipeline_mode" in inspect.signature(pl.BlockSpec).parameters
    )
except (TypeError, ValueError):
    _HAS_PIPELINE_MODE = False


def _round_up(n, m):
    return ((n + m - 1) // m) * m


def _expert_kernel(x_ref, w1_ref, w3_ref, w2_ref, o_ref, acc_ref):
    # x_ref:   (tm, hidden)   activation tile (input dtype)
    # w1_ref:  (hidden, tf)   gate weight tile (= w1.T tile), bf16
    # w3_ref:  (hidden, tf)   up   weight tile (= w3.T tile), bf16
    # w2_ref:  (tf, hidden)   down weight tile (= w2.T tile), bf16
    # o_ref:   (tm, hidden)   output tile (input dtype)
    # acc_ref: (tm, hidden)   f32 accumulator over the ffn (k) grid axis
    k = pl.program_id(1)

    @pl.when(k == 0)
    def _():
        acc_ref[...] = jnp.zeros_like(acc_ref)

    x = x_ref[...].astype(w1_ref.dtype)

    # Gate / up projections: MXU matmuls, bf16 inputs, f32 accumulation.
    h1 = jnp.dot(x, w1_ref[...], preferred_element_type=jnp.float32)
    h3 = jnp.dot(x, w3_ref[...], preferred_element_type=jnp.float32)

    # SwiGLU gating in f32 (VPU muls; sigmoid lowers to the EUP slot).
    gated = (h1 * jax.nn.sigmoid(h1)) * h3

    # Down projection: accumulate this ffn tile's contribution in f32.
    acc_ref[...] += jnp.dot(gated.astype(w2_ref.dtype), w2_ref[...],
                            preferred_element_type=jnp.float32)

    @pl.when(k == pl.num_programs(1) - 1)
    def _():
        o_ref[...] = acc_ref[...].astype(o_ref.dtype)


def prepare_expert_weights(w1, w2, w3, dtype=jnp.bfloat16):
    """One-time weight preparation -- call OUTSIDE the hot path.

    w1, w3: [ffn, hidden], w2: [hidden, ffn]  (PyTorch nn.Linear [out, in]).
    Returns (w1t [hidden, ffn], w3t [hidden, ffn], w2t [ffn, hidden]),
    cast to `dtype` (bf16 by default: MXU-native with f32 accumulation).
    """
    return (jnp.asarray(w1).T.astype(dtype),
            jnp.asarray(w3).T.astype(dtype),
            jnp.asarray(w2).T.astype(dtype))


def _pick_token_tile(n_tok, act_dtype, max_tm):
    """Token tile minimizing tail padding, sublane-aligned, and (when there are
    enough tokens) yielding >= 2 tiles so both v7x TensorCores get work."""
    sub = 16 if act_dtype == jnp.bfloat16 else 8
    max_tm = max(sub, (int(max_tm) // sub) * sub)
    n_tiles = pl.cdiv(n_tok, max_tm)
    if n_tok > 2 * sub:
        n_tiles = max(n_tiles, 2)          # megacore: keep 2 TCs busy on v7x
    tm = _round_up(pl.cdiv(n_tok, n_tiles), sub)
    return min(tm, max(_round_up(n_tok, sub), sub))


def _pick_ffn_tile(ffn, hidden, tm, act_itemsize, w_itemsize, budget):
    """Largest ffn tile whose double-buffered weight blocks + f32 accumulator +
    activation tiles fit the VMEM budget; whole ffn stays resident if it fits."""
    fixed = tm * hidden * 4 + 2 * 2 * tm * hidden * act_itemsize  # acc + x/out dbl-buf
    full = 2 * 3 * hidden * ffn * w_itemsize                      # dbl-buf w1/w3/w2
    if fixed + full <= budget or ffn <= 128:
        return ffn
    per_col = 2 * 3 * hidden * w_itemsize
    tf = ((budget - fixed) // per_col) // 128 * 128
    tf = int(max(128, min(tf, ffn)))
    while ffn % tf != 0 and tf > 128:
        tf -= 128
    if ffn % tf != 0:
        # TODO(synk): pad ffn to a multiple of 128 at weight-prep time instead
        # of falling back to resident weights here.
        return ffn
    return tf


def _build_call(n_tok, hidden, ffn, tm, tf, act_dtype, w_dtype, out_dtype,
                vmem_limit_bytes):
    n_tok_tiles = pl.cdiv(n_tok, tm)
    n_ffn_tiles = ffn // tf
    resident = n_ffn_tiles == 1

    # Grid-invariant weights need only a single VMEM buffer each.
    w_kwargs = (dict(pipeline_mode=pl.Buffered(1))
                if (resident and _HAS_PIPELINE_MODE) else {})

    act_item = jnp.dtype(act_dtype).itemsize
    w_item = jnp.dtype(w_dtype).itemsize
    w_bytes = 3 * hidden * ffn * w_item
    if not resident:
        w_bytes *= n_tok_tiles             # weights re-streamed per token tile
    cost = pl.CostEstimate(
        flops=int(3 * 2 * n_tok * hidden * ffn),
        transcendentals=int(n_tok * ffn),
        bytes_accessed=int(2 * n_tok * hidden * act_item + w_bytes),
    )

    cp_kwargs = dict(dimension_semantics=("parallel", "arbitrary"))
    if vmem_limit_bytes is not None:
        cp_kwargs["vmem_limit_bytes"] = int(vmem_limit_bytes)

    return pl.pallas_call(
        _expert_kernel,
        out_shape=jax.ShapeDtypeStruct((n_tok, hidden), out_dtype),
        grid=(n_tok_tiles, n_ffn_tiles),
        in_specs=[
            pl.BlockSpec((tm, hidden), lambda i, k: (i, 0)),
            pl.BlockSpec((hidden, tf), lambda i, k: (0, k), **w_kwargs),
            pl.BlockSpec((hidden, tf), lambda i, k: (0, k), **w_kwargs),
            pl.BlockSpec((tf, hidden), lambda i, k: (k, 0), **w_kwargs),
        ],
        out_specs=pl.BlockSpec((tm, hidden), lambda i, k: (i, 0)),
        scratch_shapes=[pltpu.VMEM((tm, hidden), jnp.float32)],
        compiler_params=pltpu.CompilerParams(**cp_kwargs),
        cost_estimate=cost,
    )


def deepseek_expert(x, w1t, w3t, w2t, *, max_tm=256,
                    vmem_budget_bytes=40 << 20):
    """SwiGLU expert forward.  x: [..., hidden]; (w1t, w3t, w2t) come from
    prepare_expert_weights()."""
    orig_shape = x.shape
    hidden = orig_shape[-1]
    x2d = x.reshape(-1, hidden)
    n_tok = x2d.shape[0]

    h1w, ffn = w1t.shape
    h3w, ffn3 = w3t.shape
    ffn2, h2w = w2t.shape
    assert hidden == h1w == h3w == h2w and ffn == ffn3 == ffn2

    act_item = jnp.dtype(x.dtype).itemsize
    w_item = jnp.dtype(w1t.dtype).itemsize

    tm = _pick_token_tile(n_tok, x.dtype, max_tm)
    tf = _pick_ffn_tile(ffn, hidden, tm, act_item, w_item, vmem_budget_bytes)

    # Raise the scoped VMEM cap only when the working set exceeds the typical
    # 32 MiB default (resident weights at production dims on v5e/v6e).
    fixed = tm * hidden * 4 + 2 * 2 * tm * hidden * act_item
    w_block_bytes = 2 * 3 * hidden * tf * w_item
    est = fixed + w_block_bytes
    vmem_limit = None
    if est > 30 << 20:
        vmem_limit = min(int(est * 1.25), 100 << 20)

    call = _build_call(n_tok, hidden, ffn, tm, tf, x.dtype, w1t.dtype,
                       x.dtype, vmem_limit)
    out2d = call(x2d, w1t, w3t, w2t)
    return out2d.reshape(orig_shape)


def _reference(x, w1, w2, w3):
    h1 = x @ w1.T
    h3 = x @ w3.T
    return (h1 * jax.nn.sigmoid(h1) * h3) @ w2.T


if __name__ == "__main__":
    key = jax.random.PRNGKey(0)
    k_x, k_w1, k_w2, k_w3 = jax.random.split(key, 4)

    # 384 tokens -> adaptive tm picks 2 token tiles of 192 (zero tail padding,
    # two "parallel" tiles for v7x megacore).
    batch, seq = 2, 192
    x = jax.random.normal(k_x, (batch, seq, HIDDEN_DIM), dtype=jnp.float32)

    # Synthetic parameters in PyTorch nn.Linear layout: [out_features, in_features].
    w1 = jax.random.normal(k_w1, (FFN_DIM, HIDDEN_DIM), dtype=jnp.float32) * 0.02
    w2 = jax.random.normal(k_w2, (HIDDEN_DIM, FFN_DIM), dtype=jnp.float32) * 0.02
    w3 = jax.random.normal(k_w3, (FFN_DIM, HIDDEN_DIM), dtype=jnp.float32) * 0.02

    # One-time weight prep (transpose + bf16 cast), outside the hot path.
    w1t, w3t, w2t = prepare_expert_weights(w1, w2, w3)

    out = jax.block_until_ready(deepseek_expert(x, w1t, w3t, w2t))
    ref = _reference(x, w1, w2, w3)
    assert out.shape == ref.shape == (batch, seq, HIDDEN_DIM)
    # bf16 MXU inputs with f32 accumulation -> compare at bf16-level tolerance.
    assert jnp.allclose(out, ref, atol=1e-2, rtol=1e-2), "mismatch vs reference"

    # Ragged token count with NO wrapper-side pad/slice: 106 tokens -> 2 token
    # tiles of 56, last block partial (read clipped, write masked by Pallas).
    xr = jax.random.normal(k_x, (2, 53, HIDDEN_DIM), dtype=jnp.float32)
    outr = jax.block_until_ready(deepseek_expert(xr, w1t, w3t, w2t))
    refr = _reference(xr, w1, w2, w3)
    assert jnp.allclose(outr, refr, atol=1e-2, rtol=1e-2), "mismatch (ragged)"

    print("KERNEL_OK")
</pallas_src>

<mosaic_0001>
module attributes {stable_mosaic.version = 11 : i64} {
  func.func @_expert_kernel(%arg0: i32, %arg1: i32, %arg2: memref<192x128xf32, #tpu.memory_space<vmem>>, %arg3: memref<128x256xbf16, #tpu.memory_space<vmem>>, %arg4: memref<128x256xbf16, #tpu.memory_space<vmem>>, %arg5: memref<256x128xbf16, #tpu.memory_space<vmem>>, %arg6: memref<192x128xf32, #tpu.memory_space<vmem>>, %arg7: memref<192x128xf32, #tpu.memory_space<vmem>>) attributes {dimension_semantics = [#tpu.dimension_semantics<parallel>, #tpu.dimension_semantics<arbitrary>], iteration_bounds = array<i64: 2, 1>, scalar_prefetch = 0 : i64, scratch_operands = 1 : i64, tpu.core_type = #tpu.core_type<tc>, window_params = [{transform_indices = @transform_0, window_bounds = array<i64: 192, 128>}, {pipeline_mode = #tpu.pipeline_mode<synchronous>, transform_indices = @transform_1, window_bounds = array<i64: 128, 256>}, {pipeline_mode = #tpu.pipeline_mode<synchronous>, transform_indices = @transform_2, window_bounds = array<i64: 128, 256>}, {pipeline_mode = #tpu.pipeline_mode<synchronous>, transform_indices = @transform_3, window_bounds = array<i64: 256, 128>}, {transform_indices = @transform_4, window_bounds = array<i64: 192, 128>}]} {
    %c0_i32 = arith.constant 0 : i32
    %0 = arith.cmpi eq, %arg1, %c0_i32 : i32
    %1 = arith.extui %0 : i1 to i32
    %c0_i32_0 = arith.constant 0 : i32
    %2 = arith.cmpi ne, %1, %c0_i32_0 : i32
    scf.if %2 {
      %cst_17 = arith.constant 0.000000e+00 : f32
      %25 = vector.broadcast %cst_17 : f32 to vector<192x128xf32>
      %c0_18 = arith.constant 0 : index
      %c0_19 = arith.constant 0 : index
      %26 = vector.load %arg7[%c0_18, %c0_19] : memref<192x128xf32, #tpu.memory_space<vmem>>, vector<192x128xf32>
      tpu.vector_store %arg7[%c0_18, %c0_19], %25 {strides = array<i32>} : memref<192x128xf32, #tpu.memory_space<vmem>>, vector<192x128xf32>,
    } else {
    }
    %c0 = arith.constant 0 : index
    %c0_1 = arith.constant 0 : index
    %3 = vector.load %arg2[%c0, %c0_1] : memref<192x128xf32, #tpu.memory_space<vmem>>, vector<192x128xf32>
    %4 = arith.truncf %3 : vector<192x128xf32> to vector<192x128xbf16>
    %c0_2 = arith.constant 0 : index
    %c0_3 = arith.constant 0 : index
    %5 = vector.load %arg3[%c0_2, %c0_3] : memref<128x256xbf16, #tpu.memory_space<vmem>>, vector<128x256xbf16>
    %cst = arith.constant dense<0.000000e+00> : vector<192x256xf32>
    %6 = tpu.matmul %4, %5, %cst {dimension_numbers = #tpu.dot_dimension_numbers<[1], [0], [0], [1], [0, 0, 1, 1], [], []>} : vector<192x128xbf16>, vector<128x256xbf16>, vector<192x256xf32> -> vector<192x256xf32>
    %c0_4 = arith.constant 0 : index
    %c0_5 = arith.constant 0 : index
    %7 = vector.load %arg4[%c0_4, %c0_5] : memref<128x256xbf16, #tpu.memory_space<vmem>>, vector<128x256xbf16>
    %cst_6 = arith.constant dense<0.000000e+00> : vector<192x256xf32>
    %8 = tpu.matmul %4, %7, %cst_6 {dimension_numbers = #tpu.dot_dimension_numbers<[1], [0], [0], [1], [0, 0, 1, 1], [], []>} : vector<192x128xbf16>, vector<128x256xbf16>, vector<192x256xf32> -> vector<192x256xf32>
    %9 = arith.negf %6 : vector<192x256xf32>
    %10 = math.exp %9 : vector<192x256xf32>
    %cst_7 = arith.constant 1.000000e+00 : f32
    %11 = vector.broadcast %cst_7 : f32 to vector<192x256xf32>
    %12 = arith.addf %11, %10 : vector<192x256xf32>
    %13 = arith.divf %11, %12 : vector<192x256xf32>
    %14 = arith.mulf %6, %13 : vector<192x256xf32>
    %15 = arith.mulf %14, %8 : vector<192x256xf32>
    %c0_8 = arith.constant 0 : index
    %c0_9 = arith.constant 0 : index
    %16 = vector.load %arg7[%c0_8, %c0_9] : memref<192x128xf32, #tpu.memory_space<vmem>>, vector<192x128xf32>
    %17 = arith.truncf %15 : vector<192x256xf32> to vector<192x256xbf16>
    %c0_10 = arith.constant 0 : index
    %c0_11 = arith.constant 0 : index
    %18 = vector.load %arg5[%c0_10, %c0_11] : memref<256x128xbf16, #tpu.memory_space<vmem>>, vector<256x128xbf16>
    %cst_12 = arith.constant dense<0.000000e+00> : vector<192x128xf32>
    %19 = tpu.matmul %17, %18, %cst_12 {dimension_numbers = #tpu.dot_dimension_numbers<[1], [0], [0], [1], [0, 0, 1, 1], [], []>} : vector<192x256xbf16>, vector<256x128xbf16>, vector<192x128xf32> -> vector<192x128xf32>
    %20 = arith.addf %16, %19 : vector<192x128xf32>
    %c0_13 = arith.constant 0 : index
    %c0_14 = arith.constant 0 : index
    %21 = vector.load %arg7[%c0_13, %c0_14] : memref<192x128xf32, #tpu.memory_space<vmem>>, vector<192x128xf32>
    tpu.vector_store %arg7[%c0_13, %c0_14], %20 {strides = array<i32>} : memref<192x128xf32, #tpu.memory_space<vmem>>, vector<192x128xf32>,
    %c0_i32_15 = arith.constant 0 : i32
    %22 = arith.cmpi eq, %arg1, %c0_i32_15 : i32
    %23 = arith.extui %22 : i1 to i32
    %c0_i32_16 = arith.constant 0 : i32
    %24 = arith.cmpi ne, %23, %c0_i32_16 : i32
    scf.if %24 {
      %c0_17 = arith.constant 0 : index
      %c0_18 = arith.constant 0 : index
      %25 = vector.load %arg7[%c0_17, %c0_18] : memref<192x128xf32, #tpu.memory_space<vmem>>, vector<192x128xf32>
      %c0_19 = arith.constant 0 : index
      %c0_20 = arith.constant 0 : index
      %26 = vector.load %arg6[%c0_19, %c0_20] : memref<192x128xf32, #tpu.memory_space<vmem>>, vector<192x128xf32>
      tpu.vector_store %arg6[%c0_19, %c0_20], %25 {strides = array<i32>} : memref<192x128xf32, #tpu.memory_space<vmem>>, vector<192x128xf32>,
    } else {
    }
    return
  }
  func.func @transform_0(%arg0: i32, %arg1: i32) -> (i32, i32) {
    %c0_i32 = arith.constant 0 : i32
    %c0_i32_0 = arith.constant 0 : i32
    return %arg0, %c0_i32 : i32, i32
  }
  func.func @transform_1(%arg0: i32, %arg1: i32) -> (i32, i32) {
    %c0_i32 = arith.constant 0 : i32
    %c0_i32_0 = arith.constant 0 : i32
    return %c0_i32, %arg1 : i32, i32
  }
  func.func @transform_2(%arg0: i32, %arg1: i32) -> (i32, i32) {
    %c0_i32 = arith.constant 0 : i32
    %c0_i32_0 = arith.constant 0 : i32
    return %c0_i32, %arg1 : i32, i32
  }
  func.func @transform_3(%arg0: i32, %arg1: i32) -> (i32, i32) {
    %c0_i32 = arith.constant 0 : i32
    %c0_i32_0 = arith.constant 0 : i32
    return %arg1, %c0_i32 : i32, i32
  }
  func.func @transform_4(%arg0: i32, %arg1: i32) -> (i32, i32) {
    %c0_i32 = arith.constant 0 : i32
    %c0_i32_0 = arith.constant 0 : i32
    return %arg0, %c0_i32 : i32, i32
  }
}

</mosaic_0001>

<llo_original>
// kernel: tpu_custom_call.1
$region0: #{tpu_custom_call.1}
  #allocation0 [shape = 'u32[]', space=smem, size = 0x4, offset = 0x4, fixed_abs, tag = 'smem constant byte address 0x4 - core index']
  #allocation1 [shape = 'u32[144,128]{1,0:T(1,128)}', space=vmem, size = 0x12000, scoped, tag = 'internal scratch']
  #allocation2 [shape = 'f32[192,128]{1,0:T(8,128)}', space=vmem, size = 0x18000, scoped, tag = 'scratch operand']
  %s0 = inlined_call_operand.hbm [shape: f32[384,128], index: 0, kind: input, shape index: {}]
  %s1 = inlined_call_operand.hbm [shape: bf16[128,256], index: 1, kind: input, shape index: {}]
  %s2 = inlined_call_operand.hbm [shape: bf16[128,256], index: 2, kind: input, shape index: {}]
  %s3 = inlined_call_operand.hbm [shape: bf16[256,128], index: 3, kind: input, shape index: {}]
  %s4 = inlined_call_operand.hbm [shape: f32[384,128], index: 4, kind: output, shape index: {}]
  %s5 = sld [smem:[#allocation0]]
  $region73: #{tpu_custom_call.1} parent=0
    _
  %s7 = ssub.s32 1, %s5
  %s8 = scalar_select 0, %s7, %s5
  $region1: #{tpu_custom_call.1} parent=0
    #allocation3 [shape = 'u8[196608]{0}', space=vmem, size = 0x30000, scoped, tag = 'input window, operand 0']
    #allocation4 [shape = 's32[2]{0}', space=sflag, size = 0x8, scoped, tag = 'scoped memory for tpu_custom_call.1']
    #allocation5 [shape = 's32[2]{0}', space=sflag, size = 0x8, scoped, tag = 'scoped memory for tpu_custom_call.1']
    #allocation6 [shape = 'u8[65536]{0}', space=vmem, size = 0x10000, scoped, tag = 'input window, operand 1, single buffered']
    #allocation7 [shape = 's32[1]{0}', space=sflag, size = 0x4, scoped, tag = 'scoped memory for tpu_custom_call.1']
    #allocation8 [shape = 'u8[65536]{0}', space=vmem, size = 0x10000, scoped, tag = 'input window, operand 2, single buffered']
    #allocation9 [shape = 'u8[65536]{0}', space=vmem, size = 0x10000, scoped, tag = 'input window, operand 3, single buffered']
    #allocation10 [shape = 's32[1]{0}', space=sflag, size = 0x4, scoped, tag = 'scoped memory for tpu_custom_call.1']
    #allocation11 [shape = 'u8[196608]{0}', space=vmem, size = 0x30000, scoped, tag = 'output window, operand 0']
    %9 = vsyncpa [#allocation4], 0
    %s10 = scalar_lea.sflag [#allocation4], 1
    %11 = vsyncpa %s10, 0
    %12 = vsyncpa [#allocation7], 0
    %13 = vsyncpa [#allocation10], 0
    %14 = vsyncpa [#allocation5], 0
    %s15 = scalar_lea.sflag [#allocation5], 1
    %16 = vsyncpa %s15, 0
    loop: start=0, step=1, limit=4
    $region2: #{tpu_custom_call.1} parent=1 // loop_pre_header
      _
    $region3: #{tpu_custom_call.1} parent=1 // loop_header
      %s18 = sphi 0, %s22
      %p19 = scmp.ge.s32.totalorder %s18, 4
      %s25 = sphi 0, %s37
      %s26 = sphi 0, %s33
      %s27 = sphi 0, %s25
      %s28 = sphi 0, %s26
      %s29 = sphi 0, %s27
      %s30 = sphi 0, %s28
      %s40 = sphi 0, %s42
      %s43 = sphi 0, %s40
      %s44 = sphi 0, %s43
      %s60 = sphi 0, %s44
      %s66 = sphi 0, %s68
      %s69 = sphi 0, %s66
      %s70 = sphi 0, %s69
      %s86 = sphi 0, %s70
      %s92 = sphi 0, %s94
      %s95 = sphi 0, %s92
      %s96 = sphi 0, %s95
      %s112 = sphi 0, %s96
      %s118 = sphi 0, %s120
      %s121 = sphi 0, %s118
      %s122 = sphi 0, %s121
      %s138 = sphi 0, %s122
      %s144 = sphi 0, %s146
      %s147 = sphi 0, %s144
      %s148 = sphi 0, %s147
      %s164 = sphi 0, %s148
    $region4: #{tpu_custom_call.1} parent=1 // loop_header_branch
      %21 = sbr.rel (%p19) target = $region8
    $region5: #{tpu_custom_call.1} parent=1 // loop_body
      %s23 = ssub.s32 %s18, 1
      %s24 = ssub.s32 %s18, 2
      %s31 = sadd.s32 1, %s26
      %p32 = scmp.ge.s32.totalorder %s31, 1
      %s33 = scalar_select %p32, 0, %s31
      %s34 = sadd.s32 1, %s25
      %s35 = scalar_select %p32, %s34, %s25
      %p36 = scmp.ge.s32.totalorder %s35, 2
      %s37 = scalar_select %p36, 0, %s35
      %s38 = ssub.s32 %s25, %s37
      %p39 = scmp.eq.s32.totalorder %s38, 0
      %s41 = sadd.s32 %s40, 1
      %s42 = scalar_select %p39, %s40, %s41
      %p45 = pneg %p39
      %p46 = scmp.eq.s32.totalorder %s18, 1
      %p47 = por %p45, %p46
      %p48 = scmp.ne.s32.totalorder %s40, %s43
      %p49 = scmp.eq.s32.totalorder %s18, 0
      %p50 = por %p48, %p49
      %p51 = scmp.ne.s32.totalorder %s40, %s43
      %p52 = scmp.eq.s32.totalorder %s23, 1
      %p53 = por %p51, %p52
      %p54 = scmp.ne.s32.totalorder %s43, %s44
      %p55 = scmp.eq.s32.totalorder %s23, 0
      %p56 = por %p54, %p55
      %p57 = scmp.ne.s32.totalorder %s43, %s44
      %p58 = scmp.eq.s32.totalorder %s24, 1
      %p59 = por %p57, %p58
      %p61 = scmp.ne.s32.totalorder %s44, %s60
      %p62 = scmp.eq.s32.totalorder %s24, 0
      %p63 = por %p61, %p62
      %s64 = ssub.s32 %s26, %s33
      %p65 = scmp.eq.s32.totalorder %s64, 0
      %s67 = sadd.s32 %s66, 1
      %s68 = scalar_select %p65, %s66, %s67
      %p71 = pneg %p65
      %p72 = scmp.eq.s32.totalorder %s18, 1
      %p73 = por %p71, %p72
      %p74 = scmp.ne.s32.totalorder %s66, %s69
      %p75 = scmp.eq.s32.totalorder %s18, 0
      %p76 = por %p74, %p75
      %p77 = scmp.ne.s32.totalorder %s66, %s69
      %p78 = scmp.eq.s32.totalorder %s23, 1
      %p79 = por %p77, %p78
      %p80 = scmp.ne.s32.totalorder %s69, %s70
      %p81 = scmp.eq.s32.totalorder %s23, 0
      %p82 = por %p80, %p81
      %p83 = scmp.ne.s32.totalorder %s69, %s70
      %p84 = scmp.eq.s32.totalorder %s24, 1
      %p85 = por %p83, %p84
      %p87 = scmp.ne.s32.totalorder %s70, %s86
      %p88 = scmp.eq.s32.totalorder %s24, 0
      %p89 = por %p87, %p88
      %s90 = ssub.s32 %s26, %s33
      %p91 = scmp.eq.s32.totalorder %s90, 0
      %s93 = sadd.s32 %s92, 1
      %s94 = scalar_select %p91, %s92, %s93
      %p97 = pneg %p91
      %p98 = scmp.eq.s32.totalorder %s18, 1
      %p99 = por %p97, %p98
      %p100 = scmp.ne.s32.totalorder %s92, %s95
      %p101 = scmp.eq.s32.totalorder %s18, 0
      %p102 = por %p100, %p101
      %p103 = scmp.ne.s32.totalorder %s92, %s95
      %p104 = scmp.eq.s32.totalorder %s23, 1
      %p105 = por %p103, %p104
      %p106 = scmp.ne.s32.totalorder %s95, %s96
      %p107 = scmp.eq.s32.totalorder %s23, 0
      %p108 = por %p106, %p107
      %p109 = scmp.ne.s32.totalorder %s95, %s96
      %p110 = scmp.eq.s32.totalorder %s24, 1
      %p111 = por %p109, %p110
      %p113 = scmp.ne.s32.totalorder %s96, %s112
      %p114 = scmp.eq.s32.totalorder %s24, 0
      %p115 = por %p113, %p114
      %s116 = ssub.s32 %s26, %s33
      %p117 = scmp.eq.s32.totalorder %s116, 0
      %s119 = sadd.s32 %s118, 1
      %s120 = scalar_select %p117, %s118, %s119
      %p123 = pneg %p117
      %p124 = scmp.eq.s32.totalorder %s18, 1
      %p125 = por %p123, %p124
      %p126 = scmp.ne.s32.totalorder %s118, %s121
      %p127 = scmp.eq.s32.totalorder %s18, 0
      %p128 = por %p126, %p127
      %p129 = scmp.ne.s32.totalorder %s118, %s121
      %p130 = scmp.eq.s32.totalorder %s23, 1
      %p131 = por %p129, %p130
      %p132 = scmp.ne.s32.totalorder %s121, %s122
      %p133 = scmp.eq.s32.totalorder %s23, 0
      %p134 = por %p132, %p133
      %p135 = scmp.ne.s32.totalorder %s121, %s122
      %p136 = scmp.eq.s32.totalorder %s24, 1
      %p137 = por %p135, %p136
      %p139 = scmp.ne.s32.totalorder %s122, %s138
      %p140 = scmp.eq.s32.totalorder %s24, 0
      %p141 = por %p139, %p140
      %s142 = ssub.s32 %s25, %s37
      %p143 = scmp.eq.s32.totalorder %s142, 0
      %s145 = sadd.s32 %s144, 1
      %s146 = scalar_select %p143, %s144, %s145
      %p149 = pneg %p143
      %p150 = scmp.eq.s32.totalorder %s18, 1
      %p151 = por %p149, %p150
      %p152 = scmp.ne.s32.totalorder %s144, %s147
      %p153 = scmp.eq.s32.totalorder %s18, 0
      %p154 = por %p152, %p153
      %p155 = scmp.ne.s32.totalorder %s144, %s147
      %p156 = scmp.eq.s32.totalorder %s23, 1
      %p157 = por %p155, %p156
      %p158 = scmp.ne.s32.totalorder %s147, %s148
      %p159 = scmp.eq.s32.totalorder %s23, 0
      %p160 = por %p158, %p159
      %p161 = scmp.ne.s32.totalorder %s147, %s148
      %p162 = scmp.eq.s32.totalorder %s24, 1
      %p163 = por %p161, %p162
      %p165 = scmp.ne.s32.totalorder %s148, %s164
      %p166 = scmp.eq.s32.totalorder %s24, 0
      %p167 = por %p165, %p166
      %p168 = scmp.le.s32.totalorder 1, %s18
      %p169 = scmp.lt.s32.totalorder %s18, 3
      %p170 = pnand %p168, %p169
      %p171 = pneg %p170
      // Predicated region
      $region9: #{tpu_custom_call.1} parent=5 // pred_check
        _
      $region10: #{tpu_custom_call.1} parent=5 // pred_check_branch
        %173 = sbr.rel (%p170) target = $region12
      $region11: #{tpu_custom_call.1} parent=5 // pred_region
        %s174 = ssub.s32 %s18, 1
        // Predicated region
        $region13: #{tpu_custom_call.1} parent=11 // pred_check
          %p175 = pneg %p82
        $region14: #{tpu_custom_call.1} parent=11 // pred_check_branch
          %177 = sbr.rel (%p175) target = $region16
        $region15: #{tpu_custom_call.1} parent=11 // pred_region
          %s178 = smul.u32 2, %s28
          %s180 = ssub.s32 2048, 2048
          %181 = vsyncadd [#allocation7], %s180
          %s182 = smul.addr %s178, 64
          %s183 = scalar_lea.hbm %s1, %s182
          %s184 = sshll.u32 [#allocation6], 4
          %s185 = int_to_ptr.vmem [resolvable:$true] %s184
          %190 = dma.hbm_to_vmem [thread:$0]  %s183, 2048, %s185, [#allocation7], 128, 128, 8
        $region16: #{tpu_custom_call.1} parent=11 // pred_fallthru
          _
        // Predicated region
        $region17: #{tpu_custom_call.1} parent=11 // pred_check
          %p191 = pneg %p108
        $region18: #{tpu_custom_call.1} parent=11 // pred_check_branch
          %193 = sbr.rel (%p191) target = $region20
        $region19: #{tpu_custom_call.1} parent=11 // pred_region
          %s194 = smul.u32 2, %s28
          %s196 = ssub.s32 2048, 2048
          %197 = vsyncadd [#allocation7], %s196
          %s198 = smul.addr %s194, 64
          %s199 = scalar_lea.hbm %s2, %s198
          %s200 = sshll.u32 [#allocation8], 4
          %s201 = int_to_ptr.vmem [resolvable:$true] %s200
          %206 = dma.hbm_to_vmem [thread:$0]  %s199, 2048, %s201, [#allocation7], 128, 128, 8
        $region20: #{tpu_custom_call.1} parent=11 // pred_fallthru
          _
        // Predicated region
        $region21: #{tpu_custom_call.1} parent=11 // pred_check
          %p207 = pneg %p134
        $region22: #{tpu_custom_call.1} parent=11 // pred_check_branch
          %209 = sbr.rel (%p207) target = $region24
        $region23: #{tpu_custom_call.1} parent=11 // pred_region
          %s210 = smul.u32 32, %s28
          %s212 = ssub.s32 2048, 2048
          %213 = vsyncadd [#allocation10], %s212
          %s214 = smul.addr %s210, 64
          %s215 = scalar_lea.hbm %s3, %s214
          %s216 = sshll.u32 [#allocation9], 4
          %s217 = int_to_ptr.vmem [resolvable:$true] %s216
          %222 = dma.hbm_to_vmem [thread:$0]  %s215, 2048, %s217, [#allocation10], 64, 64, 4
        $region24: #{tpu_custom_call.1} parent=11 // pred_fallthru
          _
      $region12: #{tpu_custom_call.1} parent=5 // pred_fallthru
        _
      %p223 = scmp.lt.s32.totalorder %s18, 2
      // Predicated region
      $region25: #{tpu_custom_call.1} parent=5 // pred_check
        %p224 = pneg %p223
      $region26: #{tpu_custom_call.1} parent=5 // pred_check_branch
        %226 = sbr.rel (%p224) target = $region28
      $region27: #{tpu_custom_call.1} parent=5 // pred_region
        // Predicated region
        $region29: #{tpu_custom_call.1} parent=27 // pred_check
          %p227 = pneg %p50
        $region30: #{tpu_custom_call.1} parent=27 // pred_check_branch
          %229 = sbr.rel (%p227) target = $region32
        $region31: #{tpu_custom_call.1} parent=27 // pred_region
          %s230 = sand.u32 %s40, 1
          %s231 = scalar_lea.sflag [#allocation4], %s230
          %s232 = sand.u32 %s40, 1
          %s233 = smul.addr %s232, 192
          %s234 = scalar_lea.vmem [#allocation3], %s233
          %s235 = smul.u32 24, %s25
          %s237 = ssub.s32 3072, 3072
          %238 = vsyncadd %s231, %s237
          %s239 = smul.addr %s235, 128
          %s240 = scalar_lea.hbm %s0, %s239
          %s241 = sshll.u32 %s234, 4
          %s242 = int_to_ptr.vmem [resolvable:$true] %s241
          %247 = dma.hbm_to_vmem [thread:$0]  %s240, 3072, %s242, %s231, 128, 128, 8
        $region32: #{tpu_custom_call.1} parent=27 // pred_fallthru
          _
      $region28: #{tpu_custom_call.1} parent=5 // pred_fallthru
        _
      %p248 = scmp.le.s32.totalorder 1, %s18
      %p249 = scmp.lt.s32.totalorder %s18, 3
      %p250 = pnand %p248, %p249
      %p251 = pneg %p250
      // Predicated region
      $region33: #{tpu_custom_call.1} parent=5 // pred_check
        _
      $region34: #{tpu_custom_call.1} parent=5 // pred_check_branch
        %253 = sbr.rel (%p250) target = $region36
      $region35: #{tpu_custom_call.1} parent=5 // pred_region
        %s254 = ssub.s32 %s18, 1
        %s255 = sand.u32 %s43, 1
        %s256 = scalar_lea.sflag [#allocation4], %s255
        %s257 = sand.u32 %s43, 1
        %s258 = smul.addr %s257, 192
        %s259 = scalar_lea.vmem [#allocation3], %s258
        // Predicated region
        $region37: #{tpu_custom_call.1} parent=35 // pred_check
          %p260 = pneg %p56
        $region38: #{tpu_custom_call.1} parent=35 // pred_check_branch
          %262 = sbr.rel (%p260) target = $region40
        $region39: #{tpu_custom_call.1} parent=35 // pred_region
          %263 = dma.done %s256, 3072
        $region40: #{tpu_custom_call.1} parent=35 // pred_fallthru
          _
        // Predicated region
        $region41: #{tpu_custom_call.1} parent=35 // pred_check
          %p264 = pneg %p82
        $region42: #{tpu_custom_call.1} parent=35 // pred_check_branch
          %266 = sbr.rel (%p264) target = $region44
        $region43: #{tpu_custom_call.1} parent=35 // pred_region
          %267 = dma.done [#allocation7], 2048
        $region44: #{tpu_custom_call.1} parent=35 // pred_fallthru
          _
        // Predicated region
        $region45: #{tpu_custom_call.1} parent=35 // pred_check
          %p268 = pneg %p108
        $region46: #{tpu_custom_call.1} parent=35 // pred_check_branch
          %270 = sbr.rel (%p268) target = $region48
        $region47: #{tpu_custom_call.1} parent=35 // pred_region
          %271 = dma.done [#allocation7], 2048
        $region48: #{tpu_custom_call.1} parent=35 // pred_fallthru
          _
        // Predicated region
        $region49: #{tpu_custom_call.1} parent=35 // pred_check
          %p272 = pneg %p134
        $region50: #{tpu_custom_call.1} parent=35 // pred_check_branch
          %274 = sbr.rel (%p272) target = $region52
        $region51: #{tpu_custom_call.1} parent=35 // pred_region
          %275 = dma.done [#allocation10], 2048
        $region52: #{tpu_custom_call.1} parent=35 // pred_fallthru
          _
        %s276 = sand.u32 %s43, 1
        %s277 = scalar_lea.sflag [#allocation4], %s276
        %s278 = sand.u32 %s43, 1
        %s279 = smul.addr %s278, 192
        %s280 = scalar_lea.vmem [#allocation3], %s279
        %p281 = pneg %p56
        %p282 = pneg %p53
        %p283 = pneg %p82
        %p284 = pneg %p79
        %p285 = pneg %p108
        %p286 = pneg %p105
        %p287 = pneg %p134
        %p288 = pneg %p131
        %p289 = pneg %p160
        %p290 = pneg %p157
        %s291 = sand.u32 %s147, 1
        %s292 = scalar_lea.sflag [#allocation5], %s291
        %s293 = sand.u32 %s147, 1
        %s294 = smul.addr %s293, 192
        %s295 = scalar_lea.vmem [#allocation11], %s294
        %s296 = smul.u32 24, %s27
        %s297 = smul.u32 2, %s28
        %s298 = smul.u32 2, %s28
        %s299 = smul.u32 32, %s28
        %s300 = smul.u32 24, %s27
        %p302 = scmp.eq.s32.totalorder %s28, 0
        // Predicated region
        $region53: #{tpu_custom_call.1} parent=35 // pred_check
          %p303 = pneg %p302
        $region54: #{tpu_custom_call.1} parent=35 // pred_check_branch
          %305 = sbr.rel (%p303) target = $region56
        $region55: #{tpu_custom_call.1} parent=35 // pred_region
          %306 = vst [vmem:[#allocation2] sm:$0xff] 0.0
          %307 = vst [vmem:[#allocation2 + $0x8] sm:$0xff] 0.0
          %308 = vst [vmem:[#allocation2 + $0x10] sm:$0xff] 0.0
          %309 = vst [vmem:[#allocation2 + $0x18] sm:$0xff] 0.0
          %310 = vst [vmem:[#allocation2 + $0x20] sm:$0xff] 0.0
          %311 = vst [vmem:[#allocation2 + $0x28] sm:$0xff] 0.0
          %312 = vst [vmem:[#allocation2 + $0x30] sm:$0xff] 0.0
          %313 = vst [vmem:[#allocation2 + $0x38] sm:$0xff] 0.0
          %314 = vst [vmem:[#allocation2 + $0x40] sm:$0xff] 0.0
          %315 = vst [vmem:[#allocation2 + $0x48] sm:$0xff] 0.0
          %316 = vst [vmem:[#allocation2 + $0x50] sm:$0xff] 0.0
          %317 = vst [vmem:[#allocation2 + $0x58] sm:$0xff] 0.0
          %318 = vst [vmem:[#allocation2 + $0x60] sm:$0xff] 0.0
          %319 = vst [vmem:[#allocation2 + $0x68] sm:$0xff] 0.0
          %320 = vst [vmem:[#allocation2 + $0x70] sm:$0xff] 0.0
          %321 = vst [vmem:[#allocation2 + $0x78] sm:$0xff] 0.0
          %322 = vst [vmem:[#allocation2 + $0x80] sm:$0xff] 0.0
          %323 = vst [vmem:[#allocation2 + $0x88] sm:$0xff] 0.0
          %324 = vst [vmem:[#allocation2 + $0x90] sm:$0xff] 0.0
          %325 = vst [vmem:[#allocation2 + $0x98] sm:$0xff] 0.0
          %326 = vst [vmem:[#allocation2 + $0xa0] sm:$0xff] 0.0
          %327 = vst [vmem:[#allocation2 + $0xa8] sm:$0xff] 0.0
          %328 = vst [vmem:[#allocation2 + $0xb0] sm:$0xff] 0.0
          %329 = vst [vmem:[#allocation2 + $0xb8] sm:$0xff] 0.0
        $region56: #{tpu_custom_call.1} parent=35 // pred_fallthru
          _
        %v330 = vld [vmem:[%s259] sm:$0xff]
        %v331 = vld [vmem:[%s259 + $0x8] sm:$0xff]
        %v332 = vld [vmem:[%s259 + $0x10] sm:$0xff]
        %v333 = vld [vmem:[%s259 + $0x18] sm:$0xff]
        %v334 = vld [vmem:[%s259 + $0x20] sm:$0xff]
        %v335 = vld [vmem:[%s259 + $0x28] sm:$0xff]
        %v336 = vld [vmem:[%s259 + $0x30] sm:$0xff]
        %v337 = vld [vmem:[%s259 + $0x38] sm:$0xff]
        %v338 = vld [vmem:[%s259 + $0x40] sm:$0xff]
        %v339 = vld [vmem:[%s259 + $0x48] sm:$0xff]
        %v340 = vld [vmem:[%s259 + $0x50] sm:$0xff]
        %v341 = vld [vmem:[%s259 + $0x58] sm:$0xff]
        %v342 = vld [vmem:[%s259 + $0x60] sm:$0xff]
        %v343 = vld [vmem:[%s259 + $0x68] sm:$0xff]
        %v344 = vld [vmem:[%s259 + $0x70] sm:$0xff]
        %v345 = vld [vmem:[%s259 + $0x78] sm:$0xff]
        %v346 = vld [vmem:[%s259 + $0x80] sm:$0xff]
        %v347 = vld [vmem:[%s259 + $0x88] sm:$0xff]
        %v348 = vld [vmem:[%s259 + $0x90] sm:$0xff]
        %v349 = vld [vmem:[%s259 + $0x98] sm:$0xff]
        %v350 = vld [vmem:[%s259 + $0xa0] sm:$0xff]
        %v351 = vld [vmem:[%s259 + $0xa8] sm:$0xff]
        %v352 = vld [vmem:[%s259 + $0xb0] sm:$0xff]
        %v353 = vld [vmem:[%s259 + $0xb8] sm:$0xff]
        %v354 = vpack.c.bf16 %v331, %v330
        %v355 = vpack.c.bf16 %v333, %v332
        %v356 = vpack.c.bf16 %v335, %v334
        %v357 = vpack.c.bf16 %v337, %v336
        %v358 = vpack.c.bf16 %v339, %v338
        %v359 = vpack.c.bf16 %v341, %v340
        %v360 = vpack.c.bf16 %v343, %v342
        %v361 = vpack.c.bf16 %v345, %v344
        %v362 = vpack.c.bf16 %v347, %v346
        %v363 = vpack.c.bf16 %v349, %v348
        %v364 = vpack.c.bf16 %v351, %v350
        %v365 = vpack.c.bf16 %v353, %v352
        %v366 = vld [vmem:[#allocation6] sm:$0xff]
        %v367 = vld [vmem:[#allocation6 + $0x8] sm:$0xff]
        %v368 = vld [vmem:[#allocation6 + $0x10] sm:$0xff]
        %v369 = vld [vmem:[#allocation6 + $0x18] sm:$0xff]
        %v370 = vld [vmem:[#allocation6 + $0x20] sm:$0xff]
        %v371 = vld [vmem:[#allocation6 + $0x28] sm:$0xff]
        %v372 = vld [vmem:[#allocation6 + $0x30] sm:$0xff]
        %v373 = vld [vmem:[#allocation6 + $0x38] sm:$0xff]
        %v374 = vld [vmem:[#allocation6 + $0x40] sm:$0xff]
        %v375 = vld [vmem:[#allocation6 + $0x48] sm:$0xff]
        %v376 = vld [vmem:[#allocation6 + $0x50] sm:$0xff]
        %v377 = vld [vmem:[#allocation6 + $0x58] sm:$0xff]
        %v378 = vld [vmem:[#allocation6 + $0x60] sm:$0xff]
        %v379 = vld [vmem:[#allocation6 + $0x68] sm:$0xff]
        %v380 = vld [vmem:[#allocation6 + $0x70] sm:$0xff]
        %v381 = vld [vmem:[#allocation6 + $0x78] sm:$0xff]
        %v398 = vunpack.c.l.b16 %v366
        %v399 = vunpack.c.h.b16 %v366
        %v400 = vunpack.c.l.b16 %v367
        %v401 = vunpack.c.h.b16 %v367
        %v402 = vunpack.c.l.b16 %v368
        %v403 = vunpack.c.h.b16 %v368
        %v404 = vunpack.c.l.b16 %v369
        %v405 = vunpack.c.h.b16 %v369
        %v406 = vunpack.c.l.b16 %v370
        %v407 = vunpack.c.h.b16 %v370
        %v408 = vunpack.c.l.b16 %v371
        %v409 = vunpack.c.h.b16 %v371
        %v410 = vunpack.c.l.b16 %v372
        %v411 = vunpack.c.h.b16 %v372
        %v412 = vunpack.c.l.b16 %v373
        %v413 = vunpack.c.h.b16 %v373
        %v414 = vunpack.c.l.b16 %v374
        %v415 = vunpack.c.h.b16 %v374
        %v416 = vunpack.c.l.b16 %v375
        %v417 = vunpack.c.h.b16 %v375
        %v418 = vunpack.c.l.b16 %v376
        %v419 = vunpack.c.h.b16 %v376
        %v420 = vunpack.c.l.b16 %v377
        %v421 = vunpack.c.h.b16 %v377
        %v422 = vunpack.c.l.b16 %v378
        %v423 = vunpack.c.h.b16 %v378
        %v424 = vunpack.c.l.b16 %v379
        %v425 = vunpack.c.h.b16 %v379
        %v426 = vunpack.c.l.b16 %v380
        %v427 = vunpack.c.h.b16 %v380
        %v428 = vunpack.c.l.b16 %v381
        %v429 = vunpack.c.h.b16 %v381
        %v430 = vpack.c.b16 %v400, %v398
        %v431 = vpack.c.b16 %v401, %v399
        %v432 = vpack.c.b16 %v404, %v402
        %v433 = vpack.c.b16 %v405, %v403
        %v434 = vpack.c.b16 %v408, %v406
        %v435 = vpack.c.b16 %v409, %v407
        %v436 = vpack.c.b16 %v412, %v410
        %v437 = vpack.c.b16 %v413, %v411
        %v438 = vpack.c.b16 %v416, %v414
        %v439 = vpack.c.b16 %v417, %v415
        %v440 = vpack.c.b16 %v420, %v418
        %v441 = vpack.c.b16 %v421, %v419
        %v442 = vpack.c.b16 %v424, %v422
        %v443 = vpack.c.b16 %v425, %v423
        %v444 = vpack.c.b16 %v428, %v426
        %v445 = vpack.c.b16 %v429, %v427
        %462 = vmatprep.subr.bf16.mxu0 %v431
        %463 = vmatpush1.bf16.msra.mxu0 %v430
        %464 = vmatprep.subr.bf16.mxu0 %v433
        %465 = vmatpush1.bf16.msra.mxu0 %v432
        %466 = vmatprep.subr.bf16.mxu0 %v435
        %467 = vmatpush1.bf16.msra.mxu0 %v434
        %468 = vmatprep.subr.bf16.mxu0 %v437
        %469 = vmatpush1.bf16.msra.mxu0 %v436
        %470 = vmatprep.subr.bf16.mxu0 %v439
        %471 = vmatpush1.bf16.msra.mxu0 %v438
        %472 = vmatprep.subr.bf16.mxu0 %v441
        %473 = vmatpush1.bf16.msra.mxu0 %v440
        %474 = vmatprep.subr.bf16.mxu0 %v443
        %475 = vmatpush1.bf16.msra.mxu0 %v442
        %476 = vmatprep.subr.bf16.mxu0 %v445
        %477 = vmatpush1.bf16.msra.mxu0 %v444
        %478 = vmatprep.subr.bf16.mxu0 0
        %479 = vmatpush1.bf16.msra.mxu0 0
        %480 = vmatprep.subr.bf16.mxu0 0
        %481 = vmatpush1.bf16.msra.mxu0 0
        %482 = vmatprep.subr.bf16.mxu0 0
        %483 = vmatpush1.bf16.msra.mxu0 0
        %484 = vmatprep.subr.bf16.mxu0 0
        %485 = vmatpush1.bf16.msra.mxu0 0
        %486 = vmatprep.subr.bf16.mxu0 0
        %487 = vmatpush1.bf16.msra.mxu0 0
        %488 = vmatprep.subr.bf16.mxu0 0
        %489 = vmatpush1.bf16.msra.mxu0 0
        %490 = vmatprep.subr.bf16.mxu0 0
        %491 = vmatpush1.bf16.msra.mxu0 0
        %492 = vmatprep.subr.bf16.mxu0 0
        %493 = vmatpush1.bf16.msra.mxu0 0
        %494 = vmatprep.mubr.bf16.mxu0 0
        %495 = vmatmul.mubr.bf16.gmra.mrb[0].mxu0 %v354
        %v496 = vpop.f32.mrb[0].mxu0
        %v497 = vadd.f32 0.0, %v496
        %v498 = vpop.f32.mrb[0].mxu0
        %v499 = vadd.f32 0.0, %v498
        %v500 = vpop.f32.mrb[0].mxu0
        %v501 = vadd.f32 0.0, %v500
        %v502 = vpop.f32.mrb[0].mxu0
        %v503 = vadd.f32 0.0, %v502
        %504 = vmatprep.mubr.bf16.mxu0 0
        %505 = vmatmul.mubr.bf16.gmra.mrb[0].mxu0 %v355
        %v506 = vpop.f32.mrb[0].mxu0
        %v507 = vadd.f32 0.0, %v506
        %v508 = vpop.f32.mrb[0].mxu0
        %v509 = vadd.f32 0.0, %v508
        %v510 = vpop.f32.mrb[0].mxu0
        %v511 = vadd.f32 0.0, %v510
        %v512 = vpop.f32.mrb[0].mxu0
        %v513 = vadd.f32 0.0, %v512
        %514 = vmatprep.mubr.bf16.mxu0 0
        %515 = vmatmul.mubr.bf16.gmra.mrb[0].mxu0 %v356
        %v516 = vpop.f32.mrb[0].mxu0
        %v517 = vadd.f32 0.0, %v516
        %v518 = vpop.f32.mrb[0].mxu0
        %v519 = vadd.f32 0.0, %v518
        %v520 = vpop.f32.mrb[0].mxu0
        %v521 = vadd.f32 0.0, %v520
        %v522 = vpop.f32.mrb[0].mxu0
        %v523 = vadd.f32 0.0, %v522
        %524 = vmatprep.mubr.bf16.mxu0 0
        %525 = vmatmul.mubr.bf16.gmra.mrb[0].mxu0 %v357
        %v526 = vpop.f32.mrb[0].mxu0
        %v527 = vadd.f32 0.0, %v526
        %v528 = vpop.f32.mrb[0].mxu0
        %v529 = vadd.f32 0.0, %v528
        %v530 = vpop.f32.mrb[0].mxu0
        %v531 = vadd.f32 0.0, %v530
        %v532 = vpop.f32.mrb[0].mxu0
        %v533 = vadd.f32 0.0, %v532
        %534 = vmatprep.mubr.bf16.mxu0 0
        %535 = vmatmul.mubr.bf16.gmra.mrb[0].mxu0 %v358
        %v536 = vpop.f32.mrb[0].mxu0
        %v537 = vadd.f32 0.0, %v536
        %v538 = vpop.f32.mrb[0].mxu0
        %v539 = vadd.f32 0.0, %v538
        %v540 = vpop.f32.mrb[0].mxu0
        %v541 = vadd.f32 0.0, %v540
        %v542 = vpop.f32.mrb[0].mxu0
        %v543 = vadd.f32 0.0, %v542
        %544 = vmatprep.mubr.bf16.mxu0 0
        %545 = vmatmul.mubr.bf16.gmra.mrb[0].mxu0 %v359
        %v546 = vpop.f32.mrb[0].mxu0
        %v547 = vadd.f32 0.0, %v546
        %v548 = vpop.f32.mrb[0].mxu0
        %v549 = vadd.f32 0.0, %v548
        %v550 = vpop.f32.mrb[0].mxu0
        %v551 = vadd.f32 0.0, %v550
        %v552 = vpop.f32.mrb[0].mxu0
        %v553 = vadd.f32 0.0, %v552
        %554 = vmatprep.mubr.bf16.mxu0 0
        %555 = vmatmul.mubr.bf16.gmra.mrb[0].mxu0 %v360
        %v556 = vpop.f32.mrb[0].mxu0
        %v557 = vadd.f32 0.0, %v556
        %v558 = vpop.f32.mrb[0].mxu0
        %v559 = vadd.f32 0.0, %v558
        %v560 = vpop.f32.mrb[0].mxu0
        %v561 = vadd.f32 0.0, %v560
        %v562 = vpop.f32.mrb[0].mxu0
        %v563 = vadd.f32 0.0, %v562
        %564 = vmatprep.mubr.bf16.mxu0 0
        %565 = vmatmul.mubr.bf16.gmra.mrb[0].mxu0 %v361
        %v566 = vpop.f32.mrb[0].mxu0
        %v567 = vadd.f32 0.0, %v566
        %v568 = vpop.f32.mrb[0].mxu0
        %v569 = vadd.f32 0.0, %v568
        %v570 = vpop.f32.mrb[0].mxu0
        %v571 = vadd.f32 0.0, %v570
        %v572 = vpop.f32.mrb[0].mxu0
        %v573 = vadd.f32 0.0, %v572
        %574 = vmatprep.mubr.bf16.mxu0 0
        %575 = vmatmul.mubr.bf16.gmra.mrb[0].mxu0 %v362
        %v576 = vpop.f32.mrb[0].mxu0
        %v577 = vadd.f32 0.0, %v576
        %v578 = vpop.f32.mrb[0].mxu0
        %v579 = vadd.f32 0.0, %v578
        %v580 = vpop.f32.mrb[0].mxu0
        %v581 = vadd.f32 0.0, %v580
        %v582 = vpop.f32.mrb[0].mxu0
        %v583 = vadd.f32 0.0, %v582
        %584 = vmatprep.mubr.bf16.mxu0 0
        %585 = vmatmul.mubr.bf16.gmra.mrb[0].mxu0 %v363
        %v586 = vpop.f32.mrb[0].mxu0
        %v587 = vadd.f32 0.0, %v586
        %v588 = vpop.f32.mrb[0].mxu0
        %v589 = vadd.f32 0.0, %v588
        %v590 = vpop.f32.mrb[0].mxu0
        %v591 = vadd.f32 0.0, %v590
        %v592 = vpop.f32.mrb[0].mxu0
        %v593 = vadd.f32 0.0, %v592
        %594 = vmatprep.mubr.bf16.mxu0 0
        %595 = vmatmul.mubr.bf16.gmra.mrb[0].mxu0 %v364
        %v596 = vpop.f32.mrb[0].mxu0
        %v597 = vadd.f32 0.0, %v596
        %v598 = vpop.f32.mrb[0].mxu0
        %v599 = vadd.f32 0.0, %v598
        %v600 = vpop.f32.mrb[0].mxu0
        %v601 = vadd.f32 0.0, %v600
        %v602 = vpop.f32.mrb[0].mxu0
        %v603 = vadd.f32 0.0, %v602
        %604 = vmatprep.mubr.bf16.mxu0 0
        %605 = vmatmul.mubr.bf16.gmra.mrb[0].mxu0 %v365
        %v606 = vpop.f32.mrb[0].mxu0
        %v607 = vadd.f32 0.0, %v606
        %v608 = vpop.f32.mrb[0].mxu0
        %v609 = vadd.f32 0.0, %v608
        %v610 = vpop.f32.mrb[0].mxu0
        %v611 = vadd.f32 0.0, %v610
        %v612 = vpop.f32.mrb[0].mxu0
        %v613 = vadd.f32 0.0, %v612
        %614 = vdwg.mxu0
        %v615 = vld [vmem:[#allocation8] sm:$0xff]
        %v616 = vld [vmem:[#allocation8 + $0x8] sm:$0xff]
        %v617 = vld [vmem:[#allocation8 + $0x10] sm:$0xff]
        %v618 = vld [vmem:[#allocation8 + $0x18] sm:$0xff]
        %v619 = vld [vmem:[#allocation8 + $0x20] sm:$0xff]
        %v620 = vld [vmem:[#allocation8 + $0x28] sm:$0xff]
        %v621 = vld [vmem:[#allocation8 + $0x30] sm:$0xff]
        %v622 = vld [vmem:[#allocation8 + $0x38] sm:$0xff]
        %v623 = vld [vmem:[#allocation8 + $0x40] sm:$0xff]
        %v624 = vld [vmem:[#allocation8 + $0x48] sm:$0xff]
        %v625 = vld [vmem:[#allocation8 + $0x50] sm:$0xff]
        %v626 = vld [vmem:[#allocation8 + $0x58] sm:$0xff]
        %v627 = vld [vmem:[#allocation8 + $0x60] sm:$0xff]
        %v628 = vld [vmem:[#allocation8 + $0x68] sm:$0xff]
        %v629 = vld [vmem:[#allocation8 + $0x70] sm:$0xff]
        %v630 = vld [vmem:[#allocation8 + $0x78] sm:$0xff]
        %v647 = vunpack.c.l.b16 %v615
        %v648 = vunpack.c.h.b16 %v615
        %v649 = vunpack.c.l.b16 %v616
        %v650 = vunpack.c.h.b16 %v616
        %v651 = vunpack.c.l.b16 %v617
        %v652 = vunpack.c.h.b16 %v617
        %v653 = vunpack.c.l.b16 %v618
        %v654 = vunpack.c.h.b16 %v618
        %v655 = vunpack.c.l.b16 %v619
        %v656 = vunpack.c.h.b16 %v619
        %v657 = vunpack.c.l.b16 %v620
        %v658 = vunpack.c.h.b16 %v620
        %v659 = vunpack.c.l.b16 %v621
        %v660 = vunpack.c.h.b16 %v621
        %v661 = vunpack.c.l.b16 %v622
        %v662 = vunpack.c.h.b16 %v622
        %v663 = vunpack.c.l.b16 %v623
        %v664 = vunpack.c.h.b16 %v623
        %v665 = vunpack.c.l.b16 %v624
        %v666 = vunpack.c.h.b16 %v624
        %v667 = vunpack.c.l.b16 %v625
        %v668 = vunpack.c.h.b16 %v625
        %v669 = vunpack.c.l.b16 %v626
        %v670 = vunpack.c.h.b16 %v626
        %v671 = vunpack.c.l.b16 %v627
        %v672 = vunpack.c.h.b16 %v627
        %v673 = vunpack.c.l.b16 %v628
        %v674 = vunpack.c.h.b16 %v628
        %v675 = vunpack.c.l.b16 %v629
        %v676 = vunpack.c.h.b16 %v629
        %v677 = vunpack.c.l.b16 %v630
        %v678 = vunpack.c.h.b16 %v630
        %v679 = vpack.c.b16 %v649, %v647
        %v680 = vpack.c.b16 %v650, %v648
        %v681 = vpack.c.b16 %v653, %v651
        %v682 = vpack.c.b16 %v654, %v652
        %v683 = vpack.c.b16 %v657, %v655
        %v684 = vpack.c.b16 %v658, %v656
        %v685 = vpack.c.b16 %v661, %v659
        %v686 = vpack.c.b16 %v662, %v660
        %v687 = vpack.c.b16 %v665, %v663
        %v688 = vpack.c.b16 %v666, %v664
        %v689 = vpack.c.b16 %v669, %v667
        %v690 = vpack.c.b16 %v670, %v668
        %v691 = vpack.c.b16 %v673, %v671
        %v692 = vpack.c.b16 %v674, %v672
        %v693 = vpack.c.b16 %v677, %v675
        %v694 = vpack.c.b16 %v678, %v676
        %711 = vmatprep.subr.bf16.mxu0 %v680
        %712 = vmatpush1.bf16.msra.mxu0 %v679
        %713 = vmatprep.subr.bf16.mxu0 %v682
        %714 = vmatpush1.bf16.msra.mxu0 %v681
        %715 = vmatprep.subr.bf16.mxu0 %v684
        %716 = vmatpush1.bf16.msra.mxu0 %v683
        %717 = vmatprep.subr.bf16.mxu0 %v686
        %718 = vmatpush1.bf16.msra.mxu0 %v685
        %719 = vmatprep.subr.bf16.mxu0 %v688
        %720 = vmatpush1.bf16.msra.mxu0 %v687
        %721 = vmatprep.subr.bf16.mxu0 %v690
        %722 = vmatpush1.bf16.msra.mxu0 %v689
        %723 = vmatprep.subr.bf16.mxu0 %v692
        %724 = vmatpush1.bf16.msra.mxu0 %v691
        %725 = vmatprep.subr.bf16.mxu0 %v694
        %726 = vmatpush1.bf16.msra.mxu0 %v693
        %727 = vmatprep.subr.bf16.mxu0 0
        %728 = vmatpush1.bf16.msra.mxu0 0
        %729 = vmatprep.subr.bf16.mxu0 0
        %730 = vmatpush1.bf16.msra.mxu0 0
        %731 = vmatprep.subr.bf16.mxu0 0
        %732 = vmatpush1.bf16.msra.mxu0 0
        %733 = vmatprep.subr.bf16.mxu0 0
        %734 = vmatpush1.bf16.msra.mxu0 0
        %735 = vmatprep.subr.bf16.mxu0 0
        %736 = vmatpush1.bf16.msra.mxu0 0
        %737 = vmatprep.subr.bf16.mxu0 0
        %738 = vmatpush1.bf16.msra.mxu0 0
        %739 = vmatprep.subr.bf16.mxu0 0
        %740 = vmatpush1.bf16.msra.mxu0 0
        %741 = vmatprep.subr.bf16.mxu0 0
        %742 = vmatpush1.bf16.msra.mxu0 0
        %743 = vmatprep.mubr.bf16.mxu0 0
        %744 = vmatmul.mubr.bf16.gmra.mrb[0].mxu0 %v354
        %v745 = vpop.f32.mrb[0].mxu0
        %v746 = vadd.f32 0.0, %v745
        %v747 = vpop.f32.mrb[0].mxu0
        %v748 = vadd.f32 0.0, %v747
        %v749 = vpop.f32.mrb[0].mxu0
        %v750 = vadd.f32 0.0, %v749
        %v751 = vpop.f32.mrb[0].mxu0
        %v752 = vadd.f32 0.0, %v751
        %753 = vmatprep.mubr.bf16.mxu0 0
        %754 = vmatmul.mubr.bf16.gmra.mrb[0].mxu0 %v355
        %v755 = vpop.f32.mrb[0].mxu0
        %v756 = vadd.f32 0.0, %v755
        %v757 = vpop.f32.mrb[0].mxu0
        %v758 = vadd.f32 0.0, %v757
        %v759 = vpop.f32.mrb[0].mxu0
        %v760 = vadd.f32 0.0, %v759
        %v761 = vpop.f32.mrb[0].mxu0
        %v762 = vadd.f32 0.0, %v761
        %763 = vmatprep.mubr.bf16.mxu0 0
        %764 = vmatmul.mubr.bf16.gmra.mrb[0].mxu0 %v356
        %v765 = vpop.f32.mrb[0].mxu0
        %v766 = vadd.f32 0.0, %v765
        %v767 = vpop.f32.mrb[0].mxu0
        %v768 = vadd.f32 0.0, %v767
        %v769 = vpop.f32.mrb[0].mxu0
        %v770 = vadd.f32 0.0, %v769
        %v771 = vpop.f32.mrb[0].mxu0
        %v772 = vadd.f32 0.0, %v771
        %773 = vmatprep.mubr.bf16.mxu0 0
        %774 = vmatmul.mubr.bf16.gmra.mrb[0].mxu0 %v357
        %v775 = vpop.f32.mrb[0].mxu0
        %v776 = vadd.f32 0.0, %v775
        %v777 = vpop.f32.mrb[0].mxu0
        %v778 = vadd.f32 0.0, %v777
        %v779 = vpop.f32.mrb[0].mxu0
        %v780 = vadd.f32 0.0, %v779
        %v781 = vpop.f32.mrb[0].mxu0
        %v782 = vadd.f32 0.0, %v781
        %783 = vmatprep.mubr.bf16.mxu0 0
        %784 = vmatmul.mubr.bf16.gmra.mrb[0].mxu0 %v358
        %v785 = vpop.f32.mrb[0].mxu0
        %v786 = vadd.f32 0.0, %v785
        %v787 = vpop.f32.mrb[0].mxu0
        %v788 = vadd.f32 0.0, %v787
        %v789 = vpop.f32.mrb[0].mxu0
        %v790 = vadd.f32 0.0, %v789
        %v791 = vpop.f32.mrb[0].mxu0
        %v792 = vadd.f32 0.0, %v791
        %793 = vmatprep.mubr.bf16.mxu0 0
        %794 = vmatmul.mubr.bf16.gmra.mrb[0].mxu0 %v359
        %v795 = vpop.f32.mrb[0].mxu0
        %v796 = vadd.f32 0.0, %v795
        %v797 = vpop.f32.mrb[0].mxu0
        %v798 = vadd.f32 0.0, %v797
        %v799 = vpop.f32.mrb[0].mxu0
        %v800 = vadd.f32 0.0, %v799
        %v801 = vpop.f32.mrb[0].mxu0
        %v802 = vadd.f32 0.0, %v801
        %803 = vmatprep.mubr.bf16.mxu0 0
        %804 = vmatmul.mubr.bf16.gmra.mrb[0].mxu0 %v360
        %v805 = vpop.f32.mrb[0].mxu0
        %v806 = vadd.f32 0.0, %v805
        %v807 = vpop.f32.mrb[0].mxu0
        %v808 = vadd.f32 0.0, %v807
        %v809 = vpop.f32.mrb[0].mxu0
        %v810 = vadd.f32 0.0, %v809
        %v811 = vpop.f32.mrb[0].mxu0
        %v812 = vadd.f32 0.0, %v811
        %813 = vmatprep.mubr.bf16.mxu0 0
        %814 = vmatmul.mubr.bf16.gmra.mrb[0].mxu0 %v361
        %v815 = vpop.f32.mrb[0].mxu0
        %v816 = vadd.f32 0.0, %v815
        %v817 = vpop.f32.mrb[0].mxu0
        %v818 = vadd.f32 0.0, %v817
        %v819 = vpop.f32.mrb[0].mxu0
        %v820 = vadd.f32 0.0, %v819
        %v821 = vpop.f32.mrb[0].mxu0
        %v822 = vadd.f32 0.0, %v821
        %823 = vmatprep.mubr.bf16.mxu0 0
        %824 = vmatmul.mubr.bf16.gmra.mrb[0].mxu0 %v362
        %v825 = vpop.f32.mrb[0].mxu0
        %v826 = vadd.f32 0.0, %v825
        %v827 = vpop.f32.mrb[0].mxu0
        %v828 = vadd.f32 0.0, %v827
        %v829 = vpop.f32.mrb[0].mxu0
        %v830 = vadd.f32 0.0, %v829
        %v831 = vpop.f32.mrb[0].mxu0
        %v832 = vadd.f32 0.0, %v831
        %833 = vmatprep.mubr.bf16.mxu0 0
        %834 = vmatmul.mubr.bf16.gmra.mrb[0].mxu0 %v363
        %v835 = vpop.f32.mrb[0].mxu0
        %v836 = vadd.f32 0.0, %v835
        %v837 = vpop.f32.mrb[0].mxu0
        %v838 = vadd.f32 0.0, %v837
        %v839 = vpop.f32.mrb[0].mxu0
        %v840 = vadd.f32 0.0, %v839
        %v841 = vpop.f32.mrb[0].mxu0
        %v842 = vadd.f32 0.0, %v841
        %843 = vmatprep.mubr.bf16.mxu0 0
        %844 = vmatmul.mubr.bf16.gmra.mrb[0].mxu0 %v364
        %v845 = vpop.f32.mrb[0].mxu0
        %v846 = vadd.f32 0.0, %v845
        %v847 = vpop.f32.mrb[0].mxu0
        %v848 = vadd.f32 0.0, %v847
        %v849 = vpop.f32.mrb[0].mxu0
        %v850 = vadd.f32 0.0, %v849
        %v851 = vpop.f32.mrb[0].mxu0
        %v852 = vadd.f32 0.0, %v851
        %853 = vmatprep.mubr.bf16.mxu0 0
        %854 = vmatmul.mubr.bf16.gmra.mrb[0].mxu0 %v365
        %v855 = vpop.f32.mrb[0].mxu0
        %v856 = vadd.f32 0.0, %v855
        %v857 = vpop.f32.mrb[0].mxu0
        %v858 = vadd.f32 0.0, %v857
        %v859 = vpop.f32.mrb[0].mxu0
        %v860 = vadd.f32 0.0, %v859
        %v861 = vpop.f32.mrb[0].mxu0
        %v862 = vadd.f32 0.0, %v861
        %863 = vdwg.mxu0
        %v864 = vxor.u32 %v497, 2147483648
        %v865 = vxor.u32 %v499, 2147483648
        %v866 = vxor.u32 %v501, 2147483648
        %v867 = vxor.u32 %v503, 2147483648
        %v868 = vxor.u32 %v507, 2147483648
        %v869 = vxor.u32 %v509, 2147483648
        %v870 = vxor.u32 %v511, 2147483648
        %v871 = vxor.u32 %v513, 2147483648
        %v872 = vxor.u32 %v517, 2147483648
        %v873 = vxor.u32 %v519, 2147483648
        %v874 = vxor.u32 %v521, 2147483648
        %v875 = vxor.u32 %v523, 2147483648
        %v876 = vxor.u32 %v527, 2147483648
        %v877 = vxor.u32 %v529, 2147483648
        %v878 = vxor.u32 %v531, 2147483648
        %v879 = vxor.u32 %v533, 2147483648
        %v880 = vxor.u32 %v537, 2147483648
        %v881 = vxor.u32 %v539, 2147483648
        %v882 = vxor.u32 %v541, 2147483648
        %v883 = vxor.u32 %v543, 2147483648
        %v884 = vxor.u32 %v547, 2147483648
        %v885 = vxor.u32 %v549, 2147483648
        %v886 = vxor.u32 %v551, 2147483648
        %v887 = vxor.u32 %v553, 2147483648
        %v888 = vxor.u32 %v557, 2147483648
        %v889 = vxor.u32 %v559, 2147483648
        %v890 = vxor.u32 %v561, 2147483648
        %v891 = vxor.u32 %v563, 2147483648
        %v892 = vxor.u32 %v567, 2147483648
        %v893 = vxor.u32 %v569, 2147483648
        %v894 = vxor.u32 %v571, 2147483648
        %v895 = vxor.u32 %v573, 2147483648
        %v896 = vxor.u32 %v577, 2147483648
        %v897 = vxor.u32 %v579, 2147483648
        %v898 = vxor.u32 %v581, 2147483648
        %v899 = vxor.u32 %v583, 2147483648
        %v900 = vxor.u32 %v587, 2147483648
        %v901 = vxor.u32 %v589, 2147483648
        %v902 = vxor.u32 %v591, 2147483648
        %v903 = vxor.u32 %v593, 2147483648
        %v904 = vxor.u32 %v597, 2147483648
        %v905 = vxor.u32 %v599, 2147483648
        %v906 = vxor.u32 %v601, 2147483648
        %v907 = vxor.u32 %v603, 2147483648
        %v908 = vxor.u32 %v607, 2147483648
        %v909 = vxor.u32 %v609, 2147483648
        %v910 = vxor.u32 %v611, 2147483648
        %v911 = vxor.u32 %v613, 2147483648
        %v912 = vmul.f32 %v864, 1.442695
        %v913 = vpow.pop %v912
        %v914 = vmul.f32 %v865, 1.442695
        %v915 = vpow.pop %v914
        %v916 = vmul.f32 %v866, 1.442695
        %v917 = vpow.pop %v916
        %v918 = vmul.f32 %v867, 1.442695
        %v919 = vpow.pop %v918
        %v920 = vmul.f32 %v868, 1.442695
        %v921 = vpow.pop %v920
        %v922 = vmul.f32 %v869, 1.442695
        %v923 = vpow.pop %v922
        %v924 = vmul.f32 %v870, 1.442695
        %v925 = vpow.pop %v924
        %v926 = vmul.f32 %v871, 1.442695
        %v927 = vpow.pop %v926
        %v928 = vmul.f32 %v872, 1.442695
        %v929 = vpow.pop %v928
        %v930 = vmul.f32 %v873, 1.442695
        %v931 = vpow.pop %v930
        %v932 = vmul.f32 %v874, 1.442695
        %v933 = vpow.pop %v932
        %v934 = vmul.f32 %v875, 1.442695
        %v935 = vpow.pop %v934
        %v936 = vmul.f32 %v876, 1.442695
        %v937 = vpow.pop %v936
        %v938 = vmul.f32 %v877, 1.442695
        %v939 = vpow.pop %v938
        %v940 = vmul.f32 %v878, 1.442695
        %v941 = vpow.pop %v940
        %v942 = vmul.f32 %v879, 1.442695
        %v943 = vpow.pop %v942
        %v944 = vmul.f32 %v880, 1.442695
        %v945 = vpow.pop %v944
        %v946 = vmul.f32 %v881, 1.442695
        %v947 = vpow.pop %v946
        %v948 = vmul.f32 %v882, 1.442695
        %v949 = vpow.pop %v948
        %v950 = vmul.f32 %v883, 1.442695
        %v951 = vpow.pop %v950
        %v952 = vmul.f32 %v884, 1.442695
        %v953 = vpow.pop %v952
        %v954 = vmul.f32 %v885, 1.442695
        %v955 = vpow.pop %v954
        %v956 = vmul.f32 %v886, 1.442695
        %v957 = vpow.pop %v956
        %v958 = vmul.f32 %v887, 1.442695
        %v959 = vpow.pop %v958
        %v960 = vmul.f32 %v888, 1.442695
        %v961 = vpow.pop %v960
        %v962 = vmul.f32 %v889, 1.442695
        %v963 = vpow.pop %v962
        %v964 = vmul.f32 %v890, 1.442695
        %v965 = vpow.pop %v964
        %v966 = vmul.f32 %v891, 1.442695
        %v967 = vpow.pop %v966
        %v968 = vmul.f32 %v892, 1.442695
        %v969 = vpow.pop %v968
        %v970 = vmul.f32 %v893, 1.442695
        %v971 = vpow.pop %v970
        %v972 = vmul.f32 %v894, 1.442695
        %v973 = vpow.pop %v972
        %v974 = vmul.f32 %v895, 1.442695
        %v975 = vpow.pop %v974
        %v976 = vmul.f32 %v896, 1.442695
        %v977 = vpow.pop %v976
        %v978 = vmul.f32 %v897, 1.442695
        %v979 = vpow.pop %v978
        %v980 = vmul.f32 %v898, 1.442695
        %v981 = vpow.pop %v980
        %v982 = vmul.f32 %v899, 1.442695
        %v983 = vpow.pop %v982
        %v984 = vmul.f32 %v900, 1.442695
        %v985 = vpow.pop %v984
        %v986 = vmul.f32 %v901, 1.442695
        %v987 = vpow.pop %v986
        %v988 = vmul.f32 %v902, 1.442695
        %v989 = vpow.pop %v988
        %v990 = vmul.f32 %v903, 1.442695
        %v991 = vpow.pop %v990
        %v992 = vmul.f32 %v904, 1.442695
        %v993 = vpow.pop %v992
        %v994 = vmul.f32 %v905, 1.442695
        %v995 = vpow.pop %v994
        %v996 = vmul.f32 %v906, 1.442695
        %v997 = vpow.pop %v996
        %v998 = vmul.f32 %v907, 1.442695
        %v999 = vpow.pop %v998
        %v1000 = vmul.f32 %v908, 1.442695
        %v1001 = vpow.pop %v1000
        %v1002 = vmul.f32 %v909, 1.442695
        %v1003 = vpow.pop %v1002
        %v1004 = vmul.f32 %v910, 1.442695
        %v1005 = vpow.pop %v1004
        %v1006 = vmul.f32 %v911, 1.442695
        %v1007 = vpow.pop %v1006
        %v1008 = vadd.f32 %v913, 1.0
        %v1009 = vadd.f32 %v915, 1.0
        %v1010 = vadd.f32 %v917, 1.0
        %v1011 = vadd.f32 %v919, 1.0
        %v1012 = vadd.f32 %v921, 1.0
        %v1013 = vadd.f32 %v923, 1.0
        %v1014 = vadd.f32 %v925, 1.0
        %v1015 = vadd.f32 %v927, 1.0
        %v1016 = vadd.f32 %v929, 1.0
        %v1017 = vadd.f32 %v931, 1.0
        %v1018 = vadd.f32 %v933, 1.0
        %v1019 = vadd.f32 %v935, 1.0
        %v1020 = vadd.f32 %v937, 1.0
        %v1021 = vadd.f32 %v939, 1.0
        %v1022 = vadd.f32 %v941, 1.0
        %v1023 = vadd.f32 %v943, 1.0
        %v1024 = vadd.f32 %v945, 1.0
        %v1025 = vadd.f32 %v947, 1.0
        %v1026 = vadd.f32 %v949, 1.0
        %v1027 = vadd.f32 %v951, 1.0
        %v1028 = vadd.f32 %v953, 1.0
        %v1029 = vadd.f32 %v955, 1.0
        %v1030 = vadd.f32 %v957, 1.0
        %v1031 = vadd.f32 %v959, 1.0
        %v1032 = vadd.f32 %v961, 1.0
        %v1033 = vadd.f32 %v963, 1.0
        %v1034 = vadd.f32 %v965, 1.0
        %v1035 = vadd.f32 %v967, 1.0
        %v1036 = vadd.f32 %v969, 1.0
        %v1037 = vadd.f32 %v971, 1.0
        %v1038 = vadd.f32 %v973, 1.0
        %v1039 = vadd.f32 %v975, 1.0
        %v1040 = vadd.f32 %v977, 1.0
        %v1041 = vadd.f32 %v979, 1.0
        %v1042 = vadd.f32 %v981, 1.0
        %v1043 = vadd.f32 %v983, 1.0
        %v1044 = vadd.f32 %v985, 1.0
        %v1045 = vadd.f32 %v987, 1.0
        %v1046 = vadd.f32 %v989, 1.0
        %v1047 = vadd.f32 %v991, 1.0
        %v1048 = vadd.f32 %v993, 1.0
        %v1049 = vadd.f32 %v995, 1.0
        %v1050 = vadd.f32 %v997, 1.0
        %v1051 = vadd.f32 %v999, 1.0
        %v1052 = vadd.f32 %v1001, 1.0
        %v1053 = vadd.f32 %v1003, 1.0
        %v1054 = vadd.f32 %v1005, 1.0
        %v1055 = vadd.f32 %v1007, 1.0
        %v1056 = vrcp.pop %v1008
        %v1057 = vmul.f32 1.0, %v1056
        %v1058 = vrcp.pop %v1009
        %v1059 = vmul.f32 1.0, %v1058
        %v1060 = vrcp.pop %v1010
        %v1061 = vmul.f32 1.0, %v1060
        %v1062 = vrcp.pop %v1011
        %v1063 = vmul.f32 1.0, %v1062
        %v1064 = vrcp.pop %v1012
        %v1065 = vmul.f32 1.0, %v1064
        %v1066 = vrcp.pop %v1013
        %v1067 = vmul.f32 1.0, %v1066
        %v1068 = vrcp.pop %v1014
        %v1069 = vmul.f32 1.0, %v1068
        %v1070 = vrcp.pop %v1015
        %v1071 = vmul.f32 1.0, %v1070
        %v1072 = vrcp.pop %v1016
        %v1073 = vmul.f32 1.0, %v1072
        %v1074 = vrcp.pop %v1017
        %v1075 = vmul.f32 1.0, %v1074
        %v1076 = vrcp.pop %v1018
        %v1077 = vmul.f32 1.0, %v1076
        %v1078 = vrcp.pop %v1019
        %v1079 = vmul.f32 1.0, %v1078
        %v1080 = vrcp.pop %v1020
        %v1081 = vmul.f32 1.0, %v1080
        %v1082 = vrcp.pop %v1021
        %v1083 = vmul.f32 1.0, %v1082
        %v1084 = vrcp.pop %v1022
        %v1085 = vmul.f32 1.0, %v1084
        %v1086 = vrcp.pop %v1023
        %v1087 = vmul.f32 1.0, %v1086
        %v1088 = vrcp.pop %v1024
        %v1089 = vmul.f32 1.0, %v1088
        %v1090 = vrcp.pop %v1025
        %v1091 = vmul.f32 1.0, %v1090
        %v1092 = vrcp.pop %v1026
        %v1093 = vmul.f32 1.0, %v1092
        %v1094 = vrcp.pop %v1027
        %v1095 = vmul.f32 1.0, %v1094
        %v1096 = vrcp.pop %v1028
        %v1097 = vmul.f32 1.0, %v1096
        %v1098 = vrcp.pop %v1029
        %v1099 = vmul.f32 1.0, %v1098
        %v1100 = vrcp.pop %v1030
        %v1101 = vmul.f32 1.0, %v1100
        %v1102 = vrcp.pop %v1031
        %v1103 = vmul.f32 1.0, %v1102
        %v1104 = vrcp.pop %v1032
        %v1105 = vmul.f32 1.0, %v1104
        %v1106 = vrcp.pop %v1033
        %v1107 = vmul.f32 1.0, %v1106
        %v1108 = vrcp.pop %v1034
        %v1109 = vmul.f32 1.0, %v1108
        %v1110 = vrcp.pop %v1035
        %v1111 = vmul.f32 1.0, %v1110
        %v1112 = vrcp.pop %v1036
        %v1113 = vmul.f32 1.0, %v1112
        %v1114 = vrcp.pop %v1037
        %v1115 = vmul.f32 1.0, %v1114
        %v1116 = vrcp.pop %v1038
        %v1117 = vmul.f32 1.0, %v1116
        %v1118 = vrcp.pop %v1039
        %v1119 = vmul.f32 1.0, %v1118
        %v1120 = vrcp.pop %v1040
        %v1121 = vmul.f32 1.0, %v1120
        %v1122 = vrcp.pop %v1041
        %v1123 = vmul.f32 1.0, %v1122
        %v1124 = vrcp.pop %v1042
        %v1125 = vmul.f32 1.0, %v1124
        %v1126 = vrcp.pop %v1043
        %v1127 = vmul.f32 1.0, %v1126
        %v1128 = vrcp.pop %v1044
        %v1129 = vmul.f32 1.0, %v1128
        %v1130 = vrcp.pop %v1045
        %v1131 = vmul.f32 1.0, %v1130
        %v1132 = vrcp.pop %v1046
        %v1133 = vmul.f32 1.0, %v1132
        %v1134 = vrcp.pop %v1047
        %v1135 = vmul.f32 1.0, %v1134
        %v1136 = vrcp.pop %v1048
        %v1137 = vmul.f32 1.0, %v1136
        %v1138 = vrcp.pop %v1049
        %v1139 = vmul.f32 1.0, %v1138
        %v1140 = vrcp.pop %v1050
        %v1141 = vmul.f32 1.0, %v1140
        %v1142 = vrcp.pop %v1051
        %v1143 = vmul.f32 1.0, %v1142
        %v1144 = vrcp.pop %v1052
        %v1145 = vmul.f32 1.0, %v1144
        %v1146 = vrcp.pop %v1053
        %v1147 = vmul.f32 1.0, %v1146
        %v1148 = vrcp.pop %v1054
        %v1149 = vmul.f32 1.0, %v1148
        %v1150 = vrcp.pop %v1055
        %v1151 = vmul.f32 1.0, %v1150
        %v1152 = vmul.f32 %v497, %v1057
        %v1153 = vmul.f32 %v499, %v1059
        %v1154 = vmul.f32 %v501, %v1061
        %v1155 = vmul.f32 %v503, %v1063
        %v1156 = vmul.f32 %v507, %v1065
        %v1157 = vmul.f32 %v509, %v1067
        %v1158 = vmul.f32 %v511, %v1069
        %v1159 = vmul.f32 %v513, %v1071
        %v1160 = vmul.f32 %v517, %v1073
        %v1161 = vmul.f32 %v519, %v1075
        %v1162 = vmul.f32 %v521, %v1077
        %v1163 = vmul.f32 %v523, %v1079
        %v1164 = vmul.f32 %v527, %v1081
        %v1165 = vmul.f32 %v529, %v1083
        %v1166 = vmul.f32 %v531, %v1085
        %v1167 = vmul.f32 %v533, %v1087
        %v1168 = vmul.f32 %v537, %v1089
        %v1169 = vmul.f32 %v539, %v1091
        %v1170 = vmul.f32 %v541, %v1093
        %v1171 = vmul.f32 %v543, %v1095
        %v1172 = vmul.f32 %v547, %v1097
        %v1173 = vmul.f32 %v549, %v1099
        %v1174 = vmul.f32 %v551, %v1101
        %v1175 = vmul.f32 %v553, %v1103
        %v1176 = vmul.f32 %v557, %v1105
        %v1177 = vmul.f32 %v559, %v1107
        %v1178 = vmul.f32 %v561, %v1109
        %v1179 = vmul.f32 %v563, %v1111
        %v1180 = vmul.f32 %v567, %v1113
        %v1181 = vmul.f32 %v569, %v1115
        %v1182 = vmul.f32 %v571, %v1117
        %v1183 = vmul.f32 %v573, %v1119
        %v1184 = vmul.f32 %v577, %v1121
        %v1185 = vmul.f32 %v579, %v1123
        %v1186 = vmul.f32 %v581, %v1125
        %v1187 = vmul.f32 %v583, %v1127
        %v1188 = vmul.f32 %v587, %v1129
        %v1189 = vmul.f32 %v589, %v1131
        %v1190 = vmul.f32 %v591, %v1133
        %v1191 = vmul.f32 %v593, %v1135
        %v1192 = vmul.f32 %v597, %v1137
        %v1193 = vmul.f32 %v599, %v1139
        %v1194 = vmul.f32 %v601, %v1141
        %v1195 = vmul.f32 %v603, %v1143
        %v1196 = vmul.f32 %v607, %v1145
        %v1197 = vmul.f32 %v609, %v1147
        %v1198 = vmul.f32 %v611, %v1149
        %v1199 = vmul.f32 %v613, %v1151
        %v1200 = vmul.f32 %v1152, %v746
        %v1201 = vmul.f32 %v1153, %v748
        %v1202 = vmul.f32 %v1154, %v750
        %v1203 = vmul.f32 %v1155, %v752
        %v1204 = vmul.f32 %v1156, %v756
        %v1205 = vmul.f32 %v1157, %v758
        %v1206 = vmul.f32 %v1158, %v760
        %v1207 = vmul.f32 %v1159, %v762
        %v1208 = vmul.f32 %v1160, %v766
        %v1209 = vmul.f32 %v1161, %v768
        %v1210 = vmul.f32 %v1162, %v770
        %v1211 = vmul.f32 %v1163, %v772
        %v1212 = vmul.f32 %v1164, %v776
        %v1213 = vmul.f32 %v1165, %v778
        %v1214 = vmul.f32 %v1166, %v780
        %v1215 = vmul.f32 %v1167, %v782
        %v1216 = vmul.f32 %v1168, %v786
        %v1217 = vmul.f32 %v1169, %v788
        %v1218 = vmul.f32 %v1170, %v790
        %v1219 = vmul.f32 %v1171, %v792
        %v1220 = vmul.f32 %v1172, %v796
        %v1221 = vmul.f32 %v1173, %v798
        %v1222 = vmul.f32 %v1174, %v800
        %v1223 = vmul.f32 %v1175, %v802
        %v1224 = vmul.f32 %v1176, %v806
        %v1225 = vmul.f32 %v1177, %v808
        %v1226 = vmul.f32 %v1178, %v810
        %v1227 = vmul.f32 %v1179, %v812
        %v1228 = vmul.f32 %v1180, %v816
        %v1229 = vmul.f32 %v1181, %v818
        %v1230 = vmul.f32 %v1182, %v820
        %v1231 = vmul.f32 %v1183, %v822
        %v1232 = vmul.f32 %v1184, %v826
        %v1233 = vmul.f32 %v1185, %v828
        %v1234 = vmul.f32 %v1186, %v830
        %v1235 = vmul.f32 %v1187, %v832
        %v1236 = vmul.f32 %v1188, %v836
        %v1237 = vmul.f32 %v1189, %v838
        %v1238 = vmul.f32 %v1190, %v840
        %v1239 = vmul.f32 %v1191, %v842
        %v1240 = vmul.f32 %v1192, %v846
        %v1241 = vmul.f32 %v1193, %v848
        %v1242 = vmul.f32 %v1194, %v850
        %v1243 = vmul.f32 %v1195, %v852
        %v1244 = vmul.f32 %v1196, %v856
        %v1245 = vmul.f32 %v1197, %v858
        %v1246 = vmul.f32 %v1198, %v860
        %v1247 = vmul.f32 %v1199, %v862
        %v1248 = vld [vmem:[#allocation2] sm:$0xff]
        %v1249 = vld [vmem:[#allocation2 + $0x8] sm:$0xff]
        %v1250 = vld [vmem:[#allocation2 + $0x10] sm:$0xff]
        %v1251 = vld [vmem:[#allocation2 + $0x18] sm:$0xff]
        %v1252 = vld [vmem:[#allocation2 + $0x20] sm:$0xff]
        %v1253 = vld [vmem:[#allocation2 + $0x28] sm:$0xff]
        %v1254 = vld [vmem:[#allocation2 + $0x30] sm:$0xff]
        %v1255 = vld [vmem:[#allocation2 + $0x38] sm:$0xff]
        %v1256 = vld [vmem:[#allocation2 + $0x40] sm:$0xff]
        %v1257 = vld [vmem:[#allocation2 + $0x48] sm:$0xff]
        %v1258 = vld [vmem:[#allocation2 + $0x50] sm:$0xff]
        %v1259 = vld [vmem:[#allocation2 + $0x58] sm:$0xff]
        %v1260 = vld [vmem:[#allocation2 + $0x60] sm:$0xff]
        %v1261 = vld [vmem:[#allocation2 + $0x68] sm:$0xff]
        %v1262 = vld [vmem:[#allocation2 + $0x70] sm:$0xff]
        %v1263 = vld [vmem:[#allocation2 + $0x78] sm:$0xff]
        %v1264 = vld [vmem:[#allocation2 + $0x80] sm:$0xff]
        %v1265 = vld [vmem:[#allocation2 + $0x88] sm:$0xff]
        %v1266 = vld [vmem:[#allocation2 + $0x90] sm:$0xff]
        %v1267 = vld [vmem:[#allocation2 + $0x98] sm:$0xff]
        %v1268 = vld [vmem:[#allocation2 + $0xa0] sm:$0xff]
        %v1269 = vld [vmem:[#allocation2 + $0xa8] sm:$0xff]
        %v1270 = vld [vmem:[#allocation2 + $0xb0] sm:$0xff]
        %v1271 = vld [vmem:[#allocation2 + $0xb8] sm:$0xff]
        %v1272 = vpack.c.bf16 %v1202, %v1200
        %v1273 = vpack.c.bf16 %v1203, %v1201
        %v1274 = vpack.c.bf16 %v1206, %v1204
        %v1275 = vpack.c.bf16 %v1207, %v1205
        %v1276 = vpack.c.bf16 %v1210, %v1208
        %v1277 = vpack.c.bf16 %v1211, %v1209
        %v1278 = vpack.c.bf16 %v1214, %v1212
        %v1279 = vpack.c.bf16 %v1215, %v1213
        %v1280 = vpack.c.bf16 %v1218, %v1216
        %v1281 = vpack.c.bf16 %v1219, %v1217
        %v1282 = vpack.c.bf16 %v1222, %v1220
        %v1283 = vpack.c.bf16 %v1223, %v1221
        %v1284 = vpack.c.bf16 %v1226, %v1224
        %v1285 = vpack.c.bf16 %v1227, %v1225
        %v1286 = vpack.c.bf16 %v1230, %v1228
        %v1287 = vpack.c.bf16 %v1231, %v1229
        %v1288 = vpack.c.bf16 %v1234, %v1232
        %v1289 = vpack.c.bf16 %v1235, %v1233
        %v1290 = vpack.c.bf16 %v1238, %v1236
        %v1291 = vpack.c.bf16 %v1239, %v1237
        %v1292 = vpack.c.bf16 %v1242, %v1240
        %v1293 = vpack.c.bf16 %v1243, %v1241
        %v1294 = vpack.c.bf16 %v1246, %v1244
        %v1295 = vpack.c.bf16 %v1247, %v1245
        %v1296 = vld [vmem:[#allocation9] sm:$0xf]
        %v1297 = vld [vmem:[#allocation9 + $0x4] sm:$0xf]
        %v1298 = vld [vmem:[#allocation9 + $0x8] sm:$0xf]
        %v1299 = vld [vmem:[#allocation9 + $0xc] sm:$0xf]
        %v1300 = vld [vmem:[#allocation9 + $0x10] sm:$0xf]
        %v1301 = vld [vmem:[#allocation9 + $0x14] sm:$0xf]
        %v1302 = vld [vmem:[#allocation9 + $0x18] sm:$0xf]
        %v1303 = vld [vmem:[#allocation9 + $0x1c] sm:$0xf]
        %v1304 = vld [vmem:[#allocation9 + $0x20] sm:$0xf]
        %v1305 = vld [vmem:[#allocation9 + $0x24] sm:$0xf]
        %v1306 = vld [vmem:[#allocation9 + $0x28] sm:$0xf]
        %v1307 = vld [vmem:[#allocation9 + $0x2c] sm:$0xf]
        %v1308 = vld [vmem:[#allocation9 + $0x30] sm:$0xf]
        %v1309 = vld [vmem:[#allocation9 + $0x34] sm:$0xf]
        %v1310 = vld [vmem:[#allocation9 + $0x38] sm:$0xf]
        %v1311 = vld [vmem:[#allocation9 + $0x3c] sm:$0xf]
        %v1312 = vld [vmem:[#allocation9 + $0x40] sm:$0xf]
        %v1313 = vld [vmem:[#allocation9 + $0x44] sm:$0xf]
        %v1314 = vld [vmem:[#allocation9 + $0x48] sm:$0xf]
        %v1315 = vld [vmem:[#allocation9 + $0x4c] sm:$0xf]
        %v1316 = vld [vmem:[#allocation9 + $0x50] sm:$0xf]
        %v1317 = vld [vmem:[#allocation9 + $0x54] sm:$0xf]
        %v1318 = vld [vmem:[#allocation9 + $0x58] sm:$0xf]
        %v1319 = vld [vmem:[#allocation9 + $0x5c] sm:$0xf]
        %v1320 = vld [vmem:[#allocation9 + $0x60] sm:$0xf]
        %v1321 = vld [vmem:[#allocation9 + $0x64] sm:$0xf]
        %v1322 = vld [vmem:[#allocation9 + $0x68] sm:$0xf]
        %v1323 = vld [vmem:[#allocation9 + $0x6c] sm:$0xf]
        %v1324 = vld [vmem:[#allocation9 + $0x70] sm:$0xf]
        %v1325 = vld [vmem:[#allocation9 + $0x74] sm:$0xf]
        %v1326 = vld [vmem:[#allocation9 + $0x78] sm:$0xf]
        %v1327 = vld [vmem:[#allocation9 + $0x7c] sm:$0xf]
        %v1360 = vunpack.c.l.b16 %v1296
        %v1361 = vunpack.c.l.b16 %v1297
        %v1362 = vunpack.c.l.b16 %v1298
        %v1363 = vunpack.c.l.b16 %v1299
        %v1364 = vunpack.c.l.b16 %v1300
        %v1365 = vunpack.c.l.b16 %v1301
        %v1366 = vunpack.c.l.b16 %v1302
        %v1367 = vunpack.c.l.b16 %v1303
        %v1368 = vunpack.c.l.b16 %v1304
        %v1369 = vunpack.c.l.b16 %v1305
        %v1370 = vunpack.c.l.b16 %v1306
        %v1371 = vunpack.c.l.b16 %v1307
        %v1372 = vunpack.c.l.b16 %v1308
        %v1373 = vunpack.c.l.b16 %v1309
        %v1374 = vunpack.c.l.b16 %v1310
        %v1375 = vunpack.c.l.b16 %v1311
        %v1376 = vunpack.c.l.b16 %v1312
        %v1377 = vunpack.c.l.b16 %v1313
        %v1378 = vunpack.c.l.b16 %v1314
        %v1379 = vunpack.c.l.b16 %v1315
        %v1380 = vunpack.c.l.b16 %v1316
        %v1381 = vunpack.c.l.b16 %v1317
        %v1382 = vunpack.c.l.b16 %v1318
        %v1383 = vunpack.c.l.b16 %v1319
        %v1384 = vunpack.c.l.b16 %v1320
        %v1385 = vunpack.c.l.b16 %v1321
        %v1386 = vunpack.c.l.b16 %v1322
        %v1387 = vunpack.c.l.b16 %v1323
        %v1388 = vunpack.c.l.b16 %v1324
        %v1389 = vunpack.c.l.b16 %v1325
        %v1390 = vunpack.c.l.b16 %v1326
        %v1391 = vunpack.c.l.b16 %v1327
        %v1392 = vpack.c.b16 %v1361, %v1360
        %v1393 = vpack.c.b16 %v1363, %v1362
        %v1394 = vpack.c.b16 %v1365, %v1364
        %v1395 = vpack.c.b16 %v1367, %v1366
        %v1396 = vpack.c.b16 %v1369, %v1368
        %v1397 = vpack.c.b16 %v1371, %v1370
        %v1398 = vpack.c.b16 %v1373, %v1372
        %v1399 = vpack.c.b16 %v1375, %v1374
        %v1400 = vpack.c.b16 %v1377, %v1376
        %v1401 = vpack.c.b16 %v1379, %v1378
        %v1402 = vpack.c.b16 %v1381, %v1380
        %v1403 = vpack.c.b16 %v1383, %v1382
        %v1404 = vpack.c.b16 %v1385, %v1384
        %v1405 = vpack.c.b16 %v1387, %v1386
        %v1406 = vpack.c.b16 %v1389, %v1388
        %v1407 = vpack.c.b16 %v1391, %v1390
        %1424 = vmatprep.subr.bf16.mxu0 0
        %1425 = vmatpush1.bf16.msra.mxu0 %v1392
        %1426 = vmatprep.subr.bf16.mxu0 0
        %1427 = vmatpush1.bf16.msra.mxu0 %v1393
        %1428 = vmatprep.subr.bf16.mxu0 0
        %1429 = vmatpush1.bf16.msra.mxu0 %v1394
        %1430 = vmatprep.subr.bf16.mxu0 0
        %1431 = vmatpush1.bf16.msra.mxu0 %v1395
        %1432 = vmatprep.subr.bf16.mxu0 0
        %1433 = vmatpush1.bf16.msra.mxu0 %v1396
        %1434 = vmatprep.subr.bf16.mxu0 0
        %1435 = vmatpush1.bf16.msra.mxu0 %v1397
        %1436 = vmatprep.subr.bf16.mxu0 0
        %1437 = vmatpush1.bf16.msra.mxu0 %v1398
        %1438 = vmatprep.subr.bf16.mxu0 0
        %1439 = vmatpush1.bf16.msra.mxu0 %v1399
        %1440 = vmatprep.subr.bf16.mxu0 0
        %1441 = vmatpush1.bf16.msra.mxu0 %v1400
        %1442 = vmatprep.subr.bf16.mxu0 0
        %1443 = vmatpush1.bf16.msra.mxu0 %v1401
        %1444 = vmatprep.subr.bf16.mxu0 0
        %1445 = vmatpush1.bf16.msra.mxu0 %v1402
        %1446 = vmatprep.subr.bf16.mxu0 0
        %1447 = vmatpush1.bf16.msra.mxu0 %v1403
        %1448 = vmatprep.subr.bf16.mxu0 0
        %1449 = vmatpush1.bf16.msra.mxu0 %v1404
        %1450 = vmatprep.subr.bf16.mxu0 0
        %1451 = vmatpush1.bf16.msra.mxu0 %v1405
        %1452 = vmatprep.subr.bf16.mxu0 0
        %1453 = vmatpush1.bf16.msra.mxu0 %v1406
        %1454 = vmatprep.subr.bf16.mxu0 0
        %1455 = vmatpush1.bf16.msra.mxu0 %v1407
        %1456 = vmatprep.mubr.bf16.mxu0 %v1273
        %1457 = vmatmul.mubr.bf16.gmra.mrb[0].mxu0 %v1272
        %v1458 = vpop.f32.mrb[0].mxu0
        %v1459 = vadd.f32 0.0, %v1458
        %v1460 = vpop.f32.mrb[0].mxu0
        %v1461 = vpop.f32.mrb[0].mxu0
        %v1462 = vadd.f32 0.0, %v1461
        %v1463 = vpop.f32.mrb[0].mxu0
        %1464 = vmatprep.mubr.bf16.mxu0 %v1275
        %1465 = vmatmul.mubr.bf16.gmra.mrb[0].mxu0 %v1274
        %v1466 = vpop.f32.mrb[0].mxu0
        %v1467 = vadd.f32 0.0, %v1466
        %v1468 = vpop.f32.mrb[0].mxu0
        %v1469 = vpop.f32.mrb[0].mxu0
        %v1470 = vadd.f32 0.0, %v1469
        %v1471 = vpop.f32.mrb[0].mxu0
        %1472 = vmatprep.mubr.bf16.mxu0 %v1277
        %1473 = vmatmul.mubr.bf16.gmra.mrb[0].mxu0 %v1276
        %v1474 = vpop.f32.mrb[0].mxu0
        %v1475 = vadd.f32 0.0, %v1474
        %v1476 = vpop.f32.mrb[0].mxu0
        %v1477 = vpop.f32.mrb[0].mxu0
        %v1478 = vadd.f32 0.0, %v1477
        %v1479 = vpop.f32.mrb[0].mxu0
        %1480 = vmatprep.mubr.bf16.mxu0 %v1279
        %1481 = vmatmul.mubr.bf16.gmra.mrb[0].mxu0 %v1278
        %v1482 = vpop.f32.mrb[0].mxu0
        %v1483 = vadd.f32 0.0, %v1482
        %v1484 = vpop.f32.mrb[0].mxu0
        %v1485 = vpop.f32.mrb[0].mxu0
        %v1486 = vadd.f32 0.0, %v1485
        %v1487 = vpop.f32.mrb[0].mxu0
        %1488 = vmatprep.mubr.bf16.mxu0 %v1281
        %1489 = vmatmul.mubr.bf16.gmra.mrb[0].mxu0 %v1280
        %v1490 = vpop.f32.mrb[0].mxu0
        %v1491 = vadd.f32 0.0, %v1490
        %v1492 = vpop.f32.mrb[0].mxu0
        %v1493 = vpop.f32.mrb[0].mxu0
        %v1494 = vadd.f32 0.0, %v1493
        %v1495 = vpop.f32.mrb[0].mxu0
        %1496 = vmatprep.mubr.bf16.mxu0 %v1283
        %1497 = vmatmul.mubr.bf16.gmra.mrb[0].mxu0 %v1282
        %v1498 = vpop.f32.mrb[0].mxu0
        %v1499 = vadd.f32 0.0, %v1498
        %v1500 = vpop.f32.mrb[0].mxu0
        %v1501 = vpop.f32.mrb[0].mxu0
        %v1502 = vadd.f32 0.0, %v1501
        %v1503 = vpop.f32.mrb[0].mxu0
        %1504 = vmatprep.mubr.bf16.mxu0 %v1285
        %1505 = vmatmul.mubr.bf16.gmra.mrb[0].mxu0 %v1284
        %v1506 = vpop.f32.mrb[0].mxu0
        %v1507 = vadd.f32 0.0, %v1506
        %v1508 = vpop.f32.mrb[0].mxu0
        %v1509 = vpop.f32.mrb[0].mxu0
        %v1510 = vadd.f32 0.0, %v1509
        %v1511 = vpop.f32.mrb[0].mxu0
        %1512 = vmatprep.mubr.bf16.mxu0 %v1287
        %1513 = vmatmul.mubr.bf16.gmra.mrb[0].mxu0 %v1286
        %v1514 = vpop.f32.mrb[0].mxu0
        %v1515 = vadd.f32 0.0, %v1514
        %v1516 = vpop.f32.mrb[0].mxu0
        %v1517 = vpop.f32.mrb[0].mxu0
        %v1518 = vadd.f32 0.0, %v1517
        %v1519 = vpop.f32.mrb[0].mxu0
        %1520 = vmatprep.mubr.bf16.mxu0 %v1289
        %1521 = vmatmul.mubr.bf16.gmra.mrb[0].mxu0 %v1288
        %v1522 = vpop.f32.mrb[0].mxu0
        %v1523 = vadd.f32 0.0, %v1522
        %v1524 = vpop.f32.mrb[0].mxu0
        %v1525 = vpop.f32.mrb[0].mxu0
        %v1526 = vadd.f32 0.0, %v1525
        %v1527 = vpop.f32.mrb[0].mxu0
        %1528 = vmatprep.mubr.bf16.mxu0 %v1291
        %1529 = vmatmul.mubr.bf16.gmra.mrb[0].mxu0 %v1290
        %v1530 = vpop.f32.mrb[0].mxu0
        %v1531 = vadd.f32 0.0, %v1530
        %v1532 = vpop.f32.mrb[0].mxu0
        %v1533 = vpop.f32.mrb[0].mxu0
        %v1534 = vadd.f32 0.0, %v1533
        %v1535 = vpop.f32.mrb[0].mxu0
        %1536 = vmatprep.mubr.bf16.mxu0 %v1293
        %1537 = vmatmul.mubr.bf16.gmra.mrb[0].mxu0 %v1292
        %v1538 = vpop.f32.mrb[0].mxu0
        %v1539 = vadd.f32 0.0, %v1538
        %v1540 = vpop.f32.mrb[0].mxu0
        %v1541 = vpop.f32.mrb[0].mxu0
        %v1542 = vadd.f32 0.0, %v1541
        %v1543 = vpop.f32.mrb[0].mxu0
        %1544 = vmatprep.mubr.bf16.mxu0 %v1295
        %1545 = vmatmul.mubr.bf16.gmra.mrb[0].mxu0 %v1294
        %v1546 = vpop.f32.mrb[0].mxu0
        %v1547 = vadd.f32 0.0, %v1546
        %v1548 = vpop.f32.mrb[0].mxu0
        %v1549 = vpop.f32.mrb[0].mxu0
        %v1550 = vadd.f32 0.0, %v1549
        %v1551 = vpop.f32.mrb[0].mxu0
        %1552 = vdwg.mxu0
        %v1553 = vadd.f32 %v1248, %v1459
        %v1554 = vadd.f32 %v1249, %v1462
        %v1555 = vadd.f32 %v1250, %v1467
        %v1556 = vadd.f32 %v1251, %v1470
        %v1557 = vadd.f32 %v1252, %v1475
        %v1558 = vadd.f32 %v1253, %v1478
        %v1559 = vadd.f32 %v1254, %v1483
        %v1560 = vadd.f32 %v1255, %v1486
        %v1561 = vadd.f32 %v1256, %v1491
        %v1562 = vadd.f32 %v1257, %v1494
        %v1563 = vadd.f32 %v1258, %v1499
        %v1564 = vadd.f32 %v1259, %v1502
        %v1565 = vadd.f32 %v1260, %v1507
        %v1566 = vadd.f32 %v1261, %v1510
        %v1567 = vadd.f32 %v1262, %v1515
        %v1568 = vadd.f32 %v1263, %v1518
        %v1569 = vadd.f32 %v1264, %v1523
        %v1570 = vadd.f32 %v1265, %v1526
        %v1571 = vadd.f32 %v1266, %v1531
        %v1572 = vadd.f32 %v1267, %v1534
        %v1573 = vadd.f32 %v1268, %v1539
        %v1574 = vadd.f32 %v1269, %v1542
        %v1575 = vadd.f32 %v1270, %v1547
        %v1576 = vadd.f32 %v1271, %v1550
        %1577 = vst [vmem:[#allocation2] sm:$0xff] %v1553
        %1578 = vst [vmem:[#allocation2 + $0x8] sm:$0xff] %v1554
        %1579 = vst [vmem:[#allocation2 + $0x10] sm:$0xff] %v1555
        %1580 = vst [vmem:[#allocation2 + $0x18] sm:$0xff] %v1556
        %1581 = vst [vmem:[#allocation2 + $0x20] sm:$0xff] %v1557
        %1582 = vst [vmem:[#allocation2 + $0x28] sm:$0xff] %v1558
        %1583 = vst [vmem:[#allocation2 + $0x30] sm:$0xff] %v1559
        %1584 = vst [vmem:[#allocation2 + $0x38] sm:$0xff] %v1560
        %1585 = vst [vmem:[#allocation2 + $0x40] sm:$0xff] %v1561
        %1586 = vst [vmem:[#allocation2 + $0x48] sm:$0xff] %v1562
        %1587 = vst [vmem:[#allocation2 + $0x50] sm:$0xff] %v1563
        %1588 = vst [vmem:[#allocation2 + $0x58] sm:$0xff] %v1564
        %1589 = vst [vmem:[#allocation2 + $0x60] sm:$0xff] %v1565
        %1590 = vst [vmem:[#allocation2 + $0x68] sm:$0xff] %v1566
        %1591 = vst [vmem:[#allocation2 + $0x70] sm:$0xff] %v1567
        %1592 = vst [vmem:[#allocation2 + $0x78] sm:$0xff] %v1568
        %1593 = vst [vmem:[#allocation2 + $0x80] sm:$0xff] %v1569
        %1594 = vst [vmem:[#allocation2 + $0x88] sm:$0xff] %v1570
        %1595 = vst [vmem:[#allocation2 + $0x90] sm:$0xff] %v1571
        %1596 = vst [vmem:[#allocation2 + $0x98] sm:$0xff] %v1572
        %1597 = vst [vmem:[#allocation2 + $0xa0] sm:$0xff] %v1573
        %1598 = vst [vmem:[#allocation2 + $0xa8] sm:$0xff] %v1574
        %1599 = vst [vmem:[#allocation2 + $0xb0] sm:$0xff] %v1575
        %1600 = vst [vmem:[#allocation2 + $0xb8] sm:$0xff] %v1576
        // Predicated region
        $region57: #{tpu_custom_call.1} parent=35 // pred_check
          %p1601 = pneg %p302
        $region58: #{tpu_custom_call.1} parent=35 // pred_check_branch
          %1603 = sbr.rel (%p1601) target = $region60
        $region59: #{tpu_custom_call.1} parent=35 // pred_region
          %v1604 = vld [vmem:[#allocation2] sm:$0xff]
          %v1605 = vld [vmem:[#allocation2 + $0x8] sm:$0xff]
          %v1606 = vld [vmem:[#allocation2 + $0x10] sm:$0xff]
          %v1607 = vld [vmem:[#allocation2 + $0x18] sm:$0xff]
          %v1608 = vld [vmem:[#allocation2 + $0x20] sm:$0xff]
          %v1609 = vld [vmem:[#allocation2 + $0x28] sm:$0xff]
          %v1610 = vld [vmem:[#allocation2 + $0x30] sm:$0xff]
          %v1611 = vld [vmem:[#allocation2 + $0x38] sm:$0xff]
          %v1612 = vld [vmem:[#allocation2 + $0x40] sm:$0xff]
          %v1613 = vld [vmem:[#allocation2 + $0x48] sm:$0xff]
          %v1614 = vld [vmem:[#allocation2 + $0x50] sm:$0xff]
          %v1615 = vld [vmem:[#allocation2 + $0x58] sm:$0xff]
          %v1616 = vld [vmem:[#allocation2 + $0x60] sm:$0xff]
          %v1617 = vld [vmem:[#allocation2 + $0x68] sm:$0xff]
          %v1618 = vld [vmem:[#allocation2 + $0x70] sm:$0xff]
          %v1619 = vld [vmem:[#allocation2 + $0x78] sm:$0xff]
          %v1620 = vld [vmem:[#allocation2 + $0x80] sm:$0xff]
          %v1621 = vld [vmem:[#allocation2 + $0x88] sm:$0xff]
          %v1622 = vld [vmem:[#allocation2 + $0x90] sm:$0xff]
          %v1623 = vld [vmem:[#allocation2 + $0x98] sm:$0xff]
          %v1624 = vld [vmem:[#allocation2 + $0xa0] sm:$0xff]
          %v1625 = vld [vmem:[#allocation2 + $0xa8] sm:$0xff]
          %v1626 = vld [vmem:[#allocation2 + $0xb0] sm:$0xff]
          %v1627 = vld [vmem:[#allocation2 + $0xb8] sm:$0xff]
          %1628 = vst [vmem:[%s295] sm:$0xff] %v1604
          %1629 = vst [vmem:[%s295 + $0x8] sm:$0xff] %v1605
          %1630 = vst [vmem:[%s295 + $0x10] sm:$0xff] %v1606
          %1631 = vst [vmem:[%s295 + $0x18] sm:$0xff] %v1607
          %1632 = vst [vmem:[%s295 + $0x20] sm:$0xff] %v1608
          %1633 = vst [vmem:[%s295 + $0x28] sm:$0xff] %v1609
          %1634 = vst [vmem:[%s295 + $0x30] sm:$0xff] %v1610
          %1635 = vst [vmem:[%s295 + $0x38] sm:$0xff] %v1611
          %1636 = vst [vmem:[%s295 + $0x40] sm:$0xff] %v1612
          %1637 = vst [vmem:[%s295 + $0x48] sm:$0xff] %v1613
          %1638 = vst [vmem:[%s295 + $0x50] sm:$0xff] %v1614
          %1639 = vst [vmem:[%s295 + $0x58] sm:$0xff] %v1615
          %1640 = vst [vmem:[%s295 + $0x60] sm:$0xff] %v1616
          %1641 = vst [vmem:[%s295 + $0x68] sm:$0xff] %v1617
          %1642 = vst [vmem:[%s295 + $0x70] sm:$0xff] %v1618
          %1643 = vst [vmem:[%s295 + $0x78] sm:$0xff] %v1619
          %1644 = vst [vmem:[%s295 + $0x80] sm:$0xff] %v1620
          %1645 = vst [vmem:[%s295 + $0x88] sm:$0xff] %v1621
          %1646 = vst [vmem:[%s295 + $0x90] sm:$0xff] %v1622
          %1647 = vst [vmem:[%s295 + $0x98] sm:$0xff] %v1623
          %1648 = vst [vmem:[%s295 + $0xa0] sm:$0xff] %v1624
          %1649 = vst [vmem:[%s295 + $0xa8] sm:$0xff] %v1625
          %1650 = vst [vmem:[%s295 + $0xb0] sm:$0xff] %v1626
          %1651 = vst [vmem:[%s295 + $0xb8] sm:$0xff] %v1627
        $region60: #{tpu_custom_call.1} parent=35 // pred_fallthru
          _
        %s1652 = sand.u32 %s147, 1
        %s1653 = scalar_lea.sflag [#allocation5], %s1652
        %s1654 = sand.u32 %s147, 1
        %s1655 = smul.addr %s1654, 192
        %s1656 = scalar_lea.vmem [#allocation11], %s1655
        // Predicated region
        $region61: #{tpu_custom_call.1} parent=35 // pred_check
          %p1657 = pneg %p157
        $region62: #{tpu_custom_call.1} parent=35 // pred_check_branch
          %1659 = sbr.rel (%p1657) target = $region64
        $region63: #{tpu_custom_call.1} parent=35 // pred_region
          %s1660 = smul.u32 24, %s27
          %s1662 = ssub.s32 3072, 3072
          %1663 = vsyncadd %s1653, %s1662
          %s1664 = smul.addr %s1660, 128
          %s1665 = scalar_lea.hbm %s4, %s1664
          %s1666 = sshll.u32 %s1656, 4
          %s1667 = int_to_ptr.vmem [resolvable:$true] %s1666
          %1672 = dma.vmem_to_hbm [thread:$0]  %s1667, 3072, %s1665, %s1653, 128, 128, 8
        $region64: #{tpu_custom_call.1} parent=35 // pred_fallthru
          _
      $region36: #{tpu_custom_call.1} parent=5 // pred_fallthru
        _
      %p1673 = scmp.le.s32.totalorder 2, %s18
      // Predicated region
      $region65: #{tpu_custom_call.1} parent=5 // pred_check
        %p1674 = pneg %p1673
      $region66: #{tpu_custom_call.1} parent=5 // pred_check_branch
        %1676 = sbr.rel (%p1674) target = $region68
      $region67: #{tpu_custom_call.1} parent=5 // pred_region
        %s1677 = ssub.s32 %s18, 2
        // Predicated region
        $region69: #{tpu_custom_call.1} parent=67 // pred_check
          %p1678 = pneg %p163
        $region70: #{tpu_custom_call.1} parent=67 // pred_check_branch
          %1680 = sbr.rel (%p1678) target = $region72
        $region71: #{tpu_custom_call.1} parent=67 // pred_region
          %s1681 = sand.u32 %s148, 1
          %s1682 = scalar_lea.sflag [#allocation5], %s1681
          %s1683 = sand.u32 %s148, 1
          %s1684 = smul.addr %s1683, 192
          %s1685 = scalar_lea.vmem [#allocation11], %s1684
          %1686 = dma.done %s1682, 3072
        $region72: #{tpu_custom_call.1} parent=67 // pred_fallthru
          _
      $region68: #{tpu_custom_call.1} parent=5 // pred_fallthru
        _
    $region6: #{tpu_custom_call.1} parent=1 // loop_footer
      %s22 = sadd.s32 1, %s18
    $region7: #{tpu_custom_call.1} parent=1 // loop_footer_branch
      %17 = sbr.rel target = $region3
    $region8: #{tpu_custom_call.1} parent=1 // loop_exit
      _
    %1687 = vsyncpa [#allocation4], 1
    %s1688 = scalar_lea.sflag [#allocation4], 1
    %1689 = vsyncpa %s1688, 1
    %1690 = vsyncpa [#allocation7], 1
    %1691 = vsyncpa [#allocation10], 1
    %1692 = vsyncpa [#allocation5], 1
    %s1693 = scalar_lea.sflag [#allocation5], 1
    %1694 = vsyncpa %s1693, 1

</llo_original>
